<compile_context>
chip_gen: v7x
topology: tpu7x:2x2x1
jax: 0.10.0
libtpu: 0.0.40
codegen_flags: <defaults>
</compile_context>

<pallas_src>
import jax
import jax.numpy as jnp
from jax.experimental import pallas as pl
from jax.experimental.pallas import tpu as pltpu

BN_EPS = 1e-5
NORM_EPS = 1e-12


# --------------------------------------------------------------------------------------
# Kernel
# --------------------------------------------------------------------------------------
def learn_triples_kernel(x_ref, w_gates_ref, b_gates_ref, lin_w_ref, lin_b_ref, out_ref):
    """One batch tile: LSTM step (i,g,o gates) -> ReLU -> (BN folded) Linear -> L2 norm."""
    E = out_ref.shape[1]                                   # padded emb dim (multiple of 128)

    x = x_ref[...]                                         # (TB, wikiDim) bf16

    # ---- LSTM single step, h0 = c0 = 0 (forget gate & W_hh contributions vanish) ----
    gates = jnp.dot(x, w_gates_ref[...],
                    preferred_element_type=jnp.float32) + b_gates_ref[...]   # (TB, 3E) f32
    i_g = jax.nn.sigmoid(gates[:, 0 * E:1 * E])
    g_g = jnp.tanh(gates[:, 1 * E:2 * E])
    o_g = jax.nn.sigmoid(gates[:, 2 * E:3 * E])
    h = o_g * jnp.tanh(i_g * g_g)                          # (TB, E) f32

    # ---- ReLU ----
    h = jnp.maximum(h, 0.0)

    # ---- BatchNorm1d (eval) is pre-folded into lin_w / lin_b; Dropout is identity ----

    # ---- Linear (bf16 MXU, f32 accumulation) ----
    y = jnp.dot(h.astype(lin_w_ref.dtype), lin_w_ref[...],
                preferred_element_type=jnp.float32) + lin_b_ref[...]          # (TB, E) f32

    # ---- Norm: y / clamp(||y||_2, min=1e-12)  ==  y * rsqrt(max(sum(y^2), eps^2)) ----
    sumsq = jnp.sum(y * y, axis=1, keepdims=True)
    inv = jax.lax.rsqrt(jnp.maximum(sumsq, NORM_EPS * NORM_EPS))
    out_ref[...] = (y * inv).astype(out_ref.dtype)


# --------------------------------------------------------------------------------------
# Wrapper
# --------------------------------------------------------------------------------------
def learn_triples_forward(x, kp, block_b=128):
    B, wiki_dim = x.shape
    E = kp["emb_dim"]
    E_pad = kp["emb_dim_pad"]

    block_b = min(block_b, B)
    assert B % block_b == 0, "batch must be divisible by the batch tile"
    assert block_b % 16 == 0, "bf16 sublane packing wants a multiple-of-16 batch tile"

    grid = (B // block_b,)
    const = lambda i: (0, 0)

    out = pl.pallas_call(
        learn_triples_kernel,
        out_shape=jax.ShapeDtypeStruct((B, E_pad), jnp.float32),
        grid=grid,
        in_specs=[
            pl.BlockSpec((block_b, wiki_dim), lambda i: (i, 0)),   # x tile over batch
            pl.BlockSpec((wiki_dim, 3 * E_pad), const),            # LSTM input weights (i,g,o)
            pl.BlockSpec((1, 3 * E_pad), const),                   # gate biases (b_ih + b_hh)
            pl.BlockSpec((E_pad, E_pad), const),                   # Linear weights (BN folded)
            pl.BlockSpec((1, E_pad), const),                       # Linear bias (BN folded)
        ],
        out_specs=pl.BlockSpec((block_b, E_pad), lambda i: (i, 0)),
        compiler_params=pltpu.CompilerParams(
            dimension_semantics=("parallel",),
            vmem_limit_bytes=48 * 1024 * 1024,   # explicit headroom for v7x's 64 MiB VMEM
        ),
    )(x.astype(jnp.bfloat16), kp["w_gates_t"], kp["b_gates"], kp["lin_w_t"], kp["lin_b"])

    return out[:, :E]


# --------------------------------------------------------------------------------------
# Parameter construction / preprocessing
# --------------------------------------------------------------------------------------
def init_params(key, wiki_dim, emb_dim):
    """Raw PyTorch-style parameters (LSTM gate order i,f,g,o; non-trivial BN stats)."""
    ks = jax.random.split(key, 9)
    k = 1.0 / jnp.sqrt(emb_dim)
    return {
        "w_ih": jax.random.uniform(ks[0], (4 * emb_dim, wiki_dim), jnp.float32, -k, k),
        "b_ih": jax.random.uniform(ks[1], (4 * emb_dim,), jnp.float32, -k, k),
        "b_hh": jax.random.uniform(ks[2], (4 * emb_dim,), jnp.float32, -k, k),
        "lin_w": jax.random.uniform(ks[3], (emb_dim, emb_dim), jnp.float32, -k, k),
        "lin_b": jax.random.uniform(ks[4], (emb_dim,), jnp.float32, -k, k),
        "gamma": jax.random.uniform(ks[5], (emb_dim,), jnp.float32, 0.5, 1.5),
        "beta": jax.random.uniform(ks[6], (emb_dim,), jnp.float32, -0.5, 0.5),
        "mean": 0.1 * jax.random.normal(ks[7], (emb_dim,), jnp.float32),
        "var": jax.random.uniform(ks[8], (emb_dim,), jnp.float32, 0.5, 1.5),
    }


def _pad_cols(a, target):
    pad = target - a.shape[-1]
    if pad:
        a = jnp.pad(a, [(0, 0)] * (a.ndim - 1) + [(0, pad)])
    return a


def fold_params(raw, emb_dim):
    """Drop the dead forget gate, fold eval-mode BN into Linear, pad to 128 lanes, cast."""
    E = emb_dim
    E_pad = ((E + 127) // 128) * 128

    # --- LSTM input weights: keep gates i, g, o (PyTorch order i,f,g,o); f * c0 == 0 ---
    w_ih = raw["w_ih"]                                   # (4E, wikiDim)
    b = raw["b_ih"] + raw["b_hh"]                        # (4E,)
    keep = [(0 * E, 1 * E), (2 * E, 3 * E), (3 * E, 4 * E)]
    w_blocks, b_blocks = [], []
    for lo, hi in keep:
        w_blocks.append(_pad_cols(w_ih[lo:hi].T, E_pad))                 # (wikiDim, E_pad)
        b_blocks.append(_pad_cols(b[lo:hi].reshape(1, E), E_pad))        # (1, E_pad)
    w_gates_t = jnp.concatenate(w_blocks, axis=1)        # (wikiDim, 3*E_pad)
    b_gates = jnp.concatenate(b_blocks, axis=1)          # (1, 3*E_pad)

    # --- Fold BatchNorm1d (eval) into the Linear layer ---
    # BN(h) = h*scale + shift;  Linear(BN(h)) = h @ (diag(scale) @ W^T) + (shift @ W^T + b)
    scale = raw["gamma"] * jax.lax.rsqrt(raw["var"] + BN_EPS)            # (E,)
    shift = raw["beta"] - raw["mean"] * scale                            # (E,)
    lin_w_t = raw["lin_w"].T                                             # (E, E)
    lin_w_fold = scale[:, None] * lin_w_t                                # (E, E)
    lin_b_fold = shift @ lin_w_t + raw["lin_b"]                          # (E,)
    lin_w_fold = jnp.pad(lin_w_fold, ((0, E_pad - E), (0, E_pad - E)))
    lin_b_fold = _pad_cols(lin_b_fold.reshape(1, E), E_pad)

    return {
        "w_gates_t": w_gates_t.astype(jnp.bfloat16),
        "b_gates": b_gates.astype(jnp.float32),
        "lin_w_t": lin_w_fold.astype(jnp.bfloat16),
        "lin_b": lin_b_fold.astype(jnp.float32),
        "emb_dim": E,
        "emb_dim_pad": E_pad,
    }


# --------------------------------------------------------------------------------------
# References
# --------------------------------------------------------------------------------------
def reference_forward_bf16(x, kp):
    """Pure-JAX reference that mirrors the kernel's bf16/f32 numerics exactly."""
    E, Ep = kp["emb_dim"], kp["emb_dim_pad"]
    xb = x.astype(jnp.bfloat16)
    gates = jnp.dot(xb, kp["w_gates_t"], preferred_element_type=jnp.float32) + kp["b_gates"]
    i_g = jax.nn.sigmoid(gates[:, 0 * Ep:1 * Ep])
    g_g = jnp.tanh(gates[:, 1 * Ep:2 * Ep])
    o_g = jax.nn.sigmoid(gates[:, 2 * Ep:3 * Ep])
    h = jnp.maximum(o_g * jnp.tanh(i_g * g_g), 0.0)
    y = jnp.dot(h.astype(jnp.bfloat16), kp["lin_w_t"],
                preferred_element_type=jnp.float32) + kp["lin_b"]
    inv = jax.lax.rsqrt(jnp.maximum(jnp.sum(y * y, axis=1, keepdims=True), NORM_EPS ** 2))
    return (y * inv)[:, :E]


def reference_forward_f32(x, raw):
    """Module-faithful f32 reference (full LSTM gates, explicit BN, eval mode)."""
    E = raw["lin_w"].shape[0]
    gates = x @ raw["w_ih"].T + raw["b_ih"] + raw["b_hh"]
    i_g = jax.nn.sigmoid(gates[:, 0 * E:1 * E])
    g_g = jnp.tanh(gates[:, 2 * E:3 * E])
    o_g = jax.nn.sigmoid(gates[:, 3 * E:4 * E])
    h = o_g * jnp.tanh(i_g * g_g)                          # c = f*c0 + i*g with c0 = 0
    h = jnp.maximum(h, 0.0)
    h = (h - raw["mean"]) / jnp.sqrt(raw["var"] + BN_EPS) * raw["gamma"] + raw["beta"]
    y = h @ raw["lin_w"].T + raw["lin_b"]
    nrm = jnp.clip(jnp.linalg.norm(y, axis=1, keepdims=True), NORM_EPS, None)
    return y / nrm


# --------------------------------------------------------------------------------------
if __name__ == "__main__":
    # Small-but-lane-dense test shapes: batch 256 (2 grid steps of 128), wikiDim 256, embDim 128.
    B, WIKI_DIM, EMB_DIM = 256, 256, 128

    key = jax.random.PRNGKey(0)
    k_x, k_p = jax.random.split(key)
    x = jax.random.normal(k_x, (B, WIKI_DIM), jnp.float32)
    raw = init_params(k_p, WIKI_DIM, EMB_DIM)
    kp = fold_params(raw, EMB_DIM)

    out = learn_triples_forward(x, kp, block_b=128)
    out = jax.block_until_ready(out)
    assert out.shape == (B, EMB_DIM)

    # Exact-numerics check (same bf16 casts + BN fold as the kernel).
    ref_bf16 = reference_forward_bf16(x, kp)
    assert jnp.allclose(out, ref_bf16, atol=2e-3, rtol=2e-3), "kernel mismatch vs bf16 reference"

    # Module-faithful f32 check (tolerance loosened for bf16 inputs).
    ref_f32 = reference_forward_f32(x, raw)
    assert jnp.allclose(out, ref_f32, atol=2e-2, rtol=2e-2), "kernel mismatch vs f32 module reference"

    print("KERNEL_OK")
</pallas_src>

<mosaic_0001>
module attributes {stable_mosaic.version = 11 : i64} {
  func.func @learn_triples_kernel(%arg0: i32, %arg1: memref<128x256xbf16, #tpu.memory_space<vmem>>, %arg2: memref<256x384xbf16, #tpu.memory_space<vmem>>, %arg3: memref<1x384xf32, #tpu.memory_space<vmem>>, %arg4: memref<128x128xbf16, #tpu.memory_space<vmem>>, %arg5: memref<1x128xf32, #tpu.memory_space<vmem>>, %arg6: memref<128x128xf32, #tpu.memory_space<vmem>>) attributes {dimension_semantics = [#tpu.dimension_semantics<parallel>], iteration_bounds = array<i64: 2>, scalar_prefetch = 0 : i64, scratch_operands = 0 : i64, tpu.core_type = #tpu.core_type<tc>, window_params = [{transform_indices = @transform_0, window_bounds = array<i64: 128, 256>}, {pipeline_mode = #tpu.pipeline_mode<synchronous>, transform_indices = @transform_1, window_bounds = array<i64: 256, 384>}, {pipeline_mode = #tpu.pipeline_mode<synchronous>, transform_indices = @transform_2, window_bounds = array<i64: 1, 384>}, {pipeline_mode = #tpu.pipeline_mode<synchronous>, transform_indices = @transform_3, window_bounds = array<i64: 128, 128>}, {pipeline_mode = #tpu.pipeline_mode<synchronous>, transform_indices = @transform_4, window_bounds = array<i64: 1, 128>}, {transform_indices = @transform_5, window_bounds = array<i64: 128, 128>}]} {
    %c0 = arith.constant 0 : index
    %c0_0 = arith.constant 0 : index
    %0 = vector.load %arg1[%c0, %c0_0] : memref<128x256xbf16, #tpu.memory_space<vmem>>, vector<128x256xbf16>
    %c0_1 = arith.constant 0 : index
    %c0_2 = arith.constant 0 : index
    %1 = vector.load %arg2[%c0_1, %c0_2] : memref<256x384xbf16, #tpu.memory_space<vmem>>, vector<256x384xbf16>
    %cst = arith.constant dense<0.000000e+00> : vector<128x384xf32>
    %2 = tpu.matmul %0, %1, %cst {dimension_numbers = #tpu.dot_dimension_numbers<[1], [0], [0], [1], [0, 0, 1, 1], [], []>} : vector<128x256xbf16>, vector<256x384xbf16>, vector<128x384xf32> -> vector<128x384xf32>
    %c0_3 = arith.constant 0 : index
    %c0_4 = arith.constant 0 : index
    %3 = vector.load %arg3[%c0_3, %c0_4] : memref<1x384xf32, #tpu.memory_space<vmem>>, vector<1x384xf32>
    %4 = vector.broadcast %3 : vector<1x384xf32> to vector<128x384xf32>
    %5 = arith.addf %2, %4 : vector<128x384xf32>
    %6 = vector.extract_strided_slice %5 {offsets = [0, 0], sizes = [128, 128], strides = [1, 1]} : vector<128x384xf32> to vector<128x128xf32>
    %7 = arith.negf %6 : vector<128x128xf32>
    %8 = math.exp %7 : vector<128x128xf32>
    %cst_5 = arith.constant 1.000000e+00 : f32
    %9 = vector.broadcast %cst_5 : f32 to vector<128x128xf32>
    %10 = arith.addf %9, %8 : vector<128x128xf32>
    %11 = arith.divf %9, %10 : vector<128x128xf32>
    %12 = vector.extract_strided_slice %5 {offsets = [0, 128], sizes = [128, 128], strides = [1, 1]} : vector<128x384xf32> to vector<128x128xf32>
    %13 = math.tanh %12 : vector<128x128xf32>
    %14 = vector.extract_strided_slice %5 {offsets = [0, 256], sizes = [128, 128], strides = [1, 1]} : vector<128x384xf32> to vector<128x128xf32>
    %15 = arith.negf %14 : vector<128x128xf32>
    %16 = math.exp %15 : vector<128x128xf32>
    %cst_6 = arith.constant 1.000000e+00 : f32
    %17 = vector.broadcast %cst_6 : f32 to vector<128x128xf32>
    %18 = arith.addf %17, %16 : vector<128x128xf32>
    %19 = arith.divf %17, %18 : vector<128x128xf32>
    %20 = arith.mulf %11, %13 : vector<128x128xf32>
    %21 = math.tanh %20 : vector<128x128xf32>
    %22 = arith.mulf %19, %21 : vector<128x128xf32>
    %cst_7 = arith.constant 0.000000e+00 : f32
    %23 = vector.broadcast %cst_7 : f32 to vector<128x128xf32>
    %24 = arith.maximumf %22, %23 : vector<128x128xf32>
    %25 = arith.truncf %24 : vector<128x128xf32> to vector<128x128xbf16>
    %c0_8 = arith.constant 0 : index
    %c0_9 = arith.constant 0 : index
    %26 = vector.load %arg4[%c0_8, %c0_9] : memref<128x128xbf16, #tpu.memory_space<vmem>>, vector<128x128xbf16>
    %cst_10 = arith.constant dense<0.000000e+00> : vector<128x128xf32>
    %27 = tpu.matmul %25, %26, %cst_10 {dimension_numbers = #tpu.dot_dimension_numbers<[1], [0], [0], [1], [0, 0, 1, 1], [], []>} : vector<128x128xbf16>, vector<128x128xbf16>, vector<128x128xf32> -> vector<128x128xf32>
    %c0_11 = arith.constant 0 : index
    %c0_12 = arith.constant 0 : index
    %28 = vector.load %arg5[%c0_11, %c0_12] : memref<1x128xf32, #tpu.memory_space<vmem>>, vector<1x128xf32>
    %29 = vector.broadcast %28 : vector<1x128xf32> to vector<128x128xf32>
    %30 = arith.addf %27, %29 : vector<128x128xf32>
    %31 = arith.mulf %30, %30 : vector<128x128xf32>
    %cst_13 = arith.constant dense<0.000000e+00> : vector<128xf32>
    %32 = vector.multi_reduction <add>, %31, %cst_13 [1] : vector<128x128xf32> to vector<128xf32>
    %33 = vector.shape_cast %32 : vector<128xf32> to vector<128x1xf32>
    %cst_14 = arith.constant 1.000000e-24 : f32
    %34 = vector.broadcast %cst_14 : f32 to vector<128x1xf32>
    %35 = arith.maximumf %33, %34 : vector<128x1xf32>
    %36 = math.rsqrt %35 : vector<128x1xf32>
    %37 = vector.broadcast %36 : vector<128x1xf32> to vector<128x128xf32>
    %38 = arith.mulf %30, %37 : vector<128x128xf32>
    %c0_15 = arith.constant 0 : index
    %c0_16 = arith.constant 0 : index
    %39 = vector.load %arg6[%c0_15, %c0_16] : memref<128x128xf32, #tpu.memory_space<vmem>>, vector<128x128xf32>
    tpu.vector_store %arg6[%c0_15, %c0_16], %38 {strides = array<i32>} : memref<128x128xf32, #tpu.memory_space<vmem>>, vector<128x128xf32>,
    return
  }
  func.func @transform_0(%arg0: i32) -> (i32, i32) {
    %c0_i32 = arith.constant 0 : i32
    %c0_i32_0 = arith.constant 0 : i32
    return %arg0, %c0_i32 : i32, i32
  }
  func.func @transform_1(%arg0: i32) -> (i32, i32) {
    %c0_i32 = arith.constant 0 : i32
    %c0_i32_0 = arith.constant 0 : i32
    %c0_i32_1 = arith.constant 0 : i32
    return %c0_i32, %c0_i32_0 : i32, i32
  }
  func.func @transform_2(%arg0: i32) -> (i32, i32) {
    %c0_i32 = arith.constant 0 : i32
    %c0_i32_0 = arith.constant 0 : i32
    %c0_i32_1 = arith.constant 0 : i32
    return %c0_i32, %c0_i32_0 : i32, i32
  }
  func.func @transform_3(%arg0: i32) -> (i32, i32) {
    %c0_i32 = arith.constant 0 : i32
    %c0_i32_0 = arith.constant 0 : i32
    %c0_i32_1 = arith.constant 0 : i32
    return %c0_i32, %c0_i32_0 : i32, i32
  }
  func.func @transform_4(%arg0: i32) -> (i32, i32) {
    %c0_i32 = arith.constant 0 : i32
    %c0_i32_0 = arith.constant 0 : i32
    %c0_i32_1 = arith.constant 0 : i32
    return %c0_i32, %c0_i32_0 : i32, i32
  }
  func.func @transform_5(%arg0: i32) -> (i32, i32) {
    %c0_i32 = arith.constant 0 : i32
    %c0_i32_0 = arith.constant 0 : i32
    return %arg0, %c0_i32 : i32, i32
  }
}

</mosaic_0001>

<llo_original>
// kernel: tpu_custom_call.1
$region0: #{tpu_custom_call.1}
  #allocation0 [shape = 'u32[]', space=smem, size = 0x4, offset = 0x4, fixed_abs, tag = 'smem constant byte address 0x4 - core index']
  #allocation1 [shape = 'u32[144,128]{1,0:T(1,128)}', space=vmem, size = 0x12000, scoped, tag = 'internal scratch']
  %s0 = inlined_call_operand.hbm [shape: bf16[256,256], index: 0, kind: input, shape index: {}]
  %s1 = inlined_call_operand.hbm [shape: bf16[256,384], index: 1, kind: input, shape index: {}]
  %s2 = inlined_call_operand.vmem [shape: f32[1,384], index: 2, kind: input, shape index: {}]
  %s3 = inlined_call_operand.hbm [shape: bf16[128,128], index: 3, kind: input, shape index: {}]
  %s4 = inlined_call_operand.vmem [shape: f32[1,128], index: 4, kind: input, shape index: {}]
  %s5 = inlined_call_operand.hbm [shape: f32[256,128], index: 5, kind: output, shape index: {}]
  %s6 = sld [smem:[#allocation0]]
  $region65: #{tpu_custom_call.1} parent=0
    _
  %s8 = ssub.s32 1, %s6
  %s9 = scalar_select 0, %s8, %s6
  $region1: #{tpu_custom_call.1} parent=0
    #allocation2 [shape = 'u8[131072]{0}', space=vmem, size = 0x20000, scoped, tag = 'input window, operand 0']
    #allocation3 [shape = 's32[2]{0}', space=sflag, size = 0x8, scoped, tag = 'scoped memory for tpu_custom_call.1']
    #allocation4 [shape = 's32[2]{0}', space=sflag, size = 0x8, scoped, tag = 'scoped memory for tpu_custom_call.1']
    #allocation5 [shape = 'u8[196608]{0}', space=vmem, size = 0x30000, scoped, tag = 'input window, operand 1, single buffered']
    #allocation6 [shape = 's32[1]{0}', space=sflag, size = 0x4, scoped, tag = 'scoped memory for tpu_custom_call.1']
    #allocation7 [shape = 'u8[32768]{0}', space=vmem, size = 0x8000, scoped, tag = 'input window, operand 3, single buffered']
    #allocation8 [shape = 'u8[131072]{0}', space=vmem, size = 0x20000, scoped, tag = 'output window, operand 0']
    %10 = vsyncpa [#allocation3], 0
    %s11 = scalar_lea.sflag [#allocation3], 1
    %12 = vsyncpa %s11, 0
    %13 = vsyncpa [#allocation6], 0
    %14 = vsyncpa [#allocation4], 0
    %s15 = scalar_lea.sflag [#allocation4], 1
    %16 = vsyncpa %s15, 0
    loop: start=0, step=1, limit=4
    $region2: #{tpu_custom_call.1} parent=1 // loop_pre_header
      _
    $region3: #{tpu_custom_call.1} parent=1 // loop_header
      %s18 = sphi 0, %s22
      %p19 = scmp.ge.s32.totalorder %s18, 4
      %s28 = sphi 0, %s30
      %s31 = sphi 0, %s28
      %s32 = sphi 0, %s31
      %s48 = sphi 0, %s32
      %s52 = sphi 0, %s52
      %s54 = sphi 0, %s52
      %s55 = sphi 0, %s54
      %s69 = sphi 0, %s55
      %s73 = sphi 0, %s73
      %s75 = sphi 0, %s73
      %s76 = sphi 0, %s75
      %s90 = sphi 0, %s76
      %s94 = sphi 0, %s94
      %s96 = sphi 0, %s94
      %s97 = sphi 0, %s96
      %s111 = sphi 0, %s97
      %s115 = sphi 0, %s115
      %s117 = sphi 0, %s115
      %s118 = sphi 0, %s117
      %s132 = sphi 0, %s118
      %s138 = sphi 0, %s140
      %s141 = sphi 0, %s138
      %s142 = sphi 0, %s141
      %s158 = sphi 0, %s142
    $region4: #{tpu_custom_call.1} parent=1 // loop_header_branch
      %21 = sbr.rel (%p19) target = $region8
    $region5: #{tpu_custom_call.1} parent=1 // loop_body
      %s23 = ssub.s32 %s18, 1
      %s24 = ssub.s32 %s18, 2
      %s25 = sadd.s32 %s18, 1
      %s26 = ssub.s32 %s18, %s25
      %p27 = scmp.eq.s32.totalorder %s26, 0
      %s29 = sadd.s32 %s28, 1
      %s30 = scalar_select %p27, %s28, %s29
      %p33 = pneg %p27
      %p34 = scmp.eq.s32.totalorder %s18, 1
      %p35 = por %p33, %p34
      %p36 = scmp.ne.s32.totalorder %s28, %s31
      %p37 = scmp.eq.s32.totalorder %s18, 0
      %p38 = por %p36, %p37
      %p39 = scmp.ne.s32.totalorder %s28, %s31
      %p40 = scmp.eq.s32.totalorder %s23, 1
      %p41 = por %p39, %p40
      %p42 = scmp.ne.s32.totalorder %s31, %s32
      %p43 = scmp.eq.s32.totalorder %s23, 0
      %p44 = por %p42, %p43
      %p45 = scmp.ne.s32.totalorder %s31, %s32
      %p46 = scmp.eq.s32.totalorder %s24, 1
      %p47 = por %p45, %p46
      %p49 = scmp.ne.s32.totalorder %s32, %s48
      %p50 = scmp.eq.s32.totalorder %s24, 0
      %p51 = por %p49, %p50
      %s53 = sadd.s32 %s52, 1
      %p56 = scmp.eq.s32.totalorder %s18, 1
      %p57 = scmp.ne.s32.totalorder %s52, %s54
      %p58 = scmp.eq.s32.totalorder %s18, 0
      %p59 = por %p57, %p58
      %p60 = scmp.ne.s32.totalorder %s52, %s54
      %p61 = scmp.eq.s32.totalorder %s23, 1
      %p62 = por %p60, %p61
      %p63 = scmp.ne.s32.totalorder %s54, %s55
      %p64 = scmp.eq.s32.totalorder %s23, 0
      %p65 = por %p63, %p64
      %p66 = scmp.ne.s32.totalorder %s54, %s55
      %p67 = scmp.eq.s32.totalorder %s24, 1
      %p68 = por %p66, %p67
      %p70 = scmp.ne.s32.totalorder %s55, %s69
      %p71 = scmp.eq.s32.totalorder %s24, 0
      %p72 = por %p70, %p71
      %s74 = sadd.s32 %s73, 1
      %p77 = scmp.eq.s32.totalorder %s18, 1
      %p78 = scmp.ne.s32.totalorder %s73, %s75
      %p79 = scmp.eq.s32.totalorder %s18, 0
      %p80 = por %p78, %p79
      %p81 = scmp.ne.s32.totalorder %s73, %s75
      %p82 = scmp.eq.s32.totalorder %s23, 1
      %p83 = por %p81, %p82
      %p84 = scmp.ne.s32.totalorder %s75, %s76
      %p85 = scmp.eq.s32.totalorder %s23, 0
      %p86 = por %p84, %p85
      %p87 = scmp.ne.s32.totalorder %s75, %s76
      %p88 = scmp.eq.s32.totalorder %s24, 1
      %p89 = por %p87, %p88
      %p91 = scmp.ne.s32.totalorder %s76, %s90
      %p92 = scmp.eq.s32.totalorder %s24, 0
      %p93 = por %p91, %p92
      %s95 = sadd.s32 %s94, 1
      %p98 = scmp.eq.s32.totalorder %s18, 1
      %p99 = scmp.ne.s32.totalorder %s94, %s96
      %p100 = scmp.eq.s32.totalorder %s18, 0
      %p101 = por %p99, %p100
      %p102 = scmp.ne.s32.totalorder %s94, %s96
      %p103 = scmp.eq.s32.totalorder %s23, 1
      %p104 = por %p102, %p103
      %p105 = scmp.ne.s32.totalorder %s96, %s97
      %p106 = scmp.eq.s32.totalorder %s23, 0
      %p107 = por %p105, %p106
      %p108 = scmp.ne.s32.totalorder %s96, %s97
      %p109 = scmp.eq.s32.totalorder %s24, 1
      %p110 = por %p108, %p109
      %p112 = scmp.ne.s32.totalorder %s97, %s111
      %p113 = scmp.eq.s32.totalorder %s24, 0
      %p114 = por %p112, %p113
      %s116 = sadd.s32 %s115, 1
      %p119 = scmp.eq.s32.totalorder %s18, 1
      %p120 = scmp.ne.s32.totalorder %s115, %s117
      %p121 = scmp.eq.s32.totalorder %s18, 0
      %p122 = por %p120, %p121
      %p123 = scmp.ne.s32.totalorder %s115, %s117
      %p124 = scmp.eq.s32.totalorder %s23, 1
      %p125 = por %p123, %p124
      %p126 = scmp.ne.s32.totalorder %s117, %s118
      %p127 = scmp.eq.s32.totalorder %s23, 0
      %p128 = por %p126, %p127
      %p129 = scmp.ne.s32.totalorder %s117, %s118
      %p130 = scmp.eq.s32.totalorder %s24, 1
      %p131 = por %p129, %p130
      %p133 = scmp.ne.s32.totalorder %s118, %s132
      %p134 = scmp.eq.s32.totalorder %s24, 0
      %p135 = por %p133, %p134
      %s136 = ssub.s32 %s18, %s25
      %p137 = scmp.eq.s32.totalorder %s136, 0
      %s139 = sadd.s32 %s138, 1
      %s140 = scalar_select %p137, %s138, %s139
      %p143 = pneg %p137
      %p144 = scmp.eq.s32.totalorder %s18, 1
      %p145 = por %p143, %p144
      %p146 = scmp.ne.s32.totalorder %s138, %s141
      %p147 = scmp.eq.s32.totalorder %s18, 0
      %p148 = por %p146, %p147
      %p149 = scmp.ne.s32.totalorder %s138, %s141
      %p150 = scmp.eq.s32.totalorder %s23, 1
      %p151 = por %p149, %p150
      %p152 = scmp.ne.s32.totalorder %s141, %s142
      %p153 = scmp.eq.s32.totalorder %s23, 0
      %p154 = por %p152, %p153
      %p155 = scmp.ne.s32.totalorder %s141, %s142
      %p156 = scmp.eq.s32.totalorder %s24, 1
      %p157 = por %p155, %p156
      %p159 = scmp.ne.s32.totalorder %s142, %s158
      %p160 = scmp.eq.s32.totalorder %s24, 0
      %p161 = por %p159, %p160
      %p162 = scmp.le.s32.totalorder 1, %s18
      %p163 = scmp.lt.s32.totalorder %s18, 3
      %p164 = pnand %p162, %p163
      %p165 = pneg %p164
      // Predicated region
      $region9: #{tpu_custom_call.1} parent=5 // pred_check
        _
      $region10: #{tpu_custom_call.1} parent=5 // pred_check_branch
        %167 = sbr.rel (%p164) target = $region12
      $region11: #{tpu_custom_call.1} parent=5 // pred_region
        %s168 = ssub.s32 %s18, 1
        // Predicated region
        $region13: #{tpu_custom_call.1} parent=11 // pred_check
          %p169 = pneg %p65
        $region14: #{tpu_custom_call.1} parent=11 // pred_check_branch
          %171 = sbr.rel (%p169) target = $region16
        $region15: #{tpu_custom_call.1} parent=11 // pred_region
          %s173 = ssub.s32 6144, 6144
          %174 = vsyncadd [#allocation6], %s173
          %s175 = sshll.u32 [#allocation5], 4
          %s176 = int_to_ptr.vmem [resolvable:$true] %s175
          %181 = dma.hbm_to_vmem [thread:$0]  %s1, 6144, %s176, [#allocation6], 192, 192, 12
        $region16: #{tpu_custom_call.1} parent=11 // pred_fallthru
          _
        // Predicated region
        $region17: #{tpu_custom_call.1} parent=11 // pred_check
          %p182 = pneg %p86
        $region18: #{tpu_custom_call.1} parent=11 // pred_check_branch
          %184 = sbr.rel (%p182) target = $region20
        $region19: #{tpu_custom_call.1} parent=11 // pred_region
          _
        $region20: #{tpu_custom_call.1} parent=11 // pred_fallthru
          _
        // Predicated region
        $region21: #{tpu_custom_call.1} parent=11 // pred_check
          %p185 = pneg %p107
        $region22: #{tpu_custom_call.1} parent=11 // pred_check_branch
          %187 = sbr.rel (%p185) target = $region24
        $region23: #{tpu_custom_call.1} parent=11 // pred_region
          %s189 = ssub.s32 1024, 1024
          %190 = vsyncadd [#allocation6], %s189
          %s191 = sshll.u32 [#allocation7], 4
          %s192 = int_to_ptr.vmem [resolvable:$true] %s191
          %197 = dma.hbm_to_vmem [thread:$0]  %s3, 1024, %s192, [#allocation6], 64, 64, 4
        $region24: #{tpu_custom_call.1} parent=11 // pred_fallthru
          _
        // Predicated region
        $region25: #{tpu_custom_call.1} parent=11 // pred_check
          %p198 = pneg %p128
        $region26: #{tpu_custom_call.1} parent=11 // pred_check_branch
          %200 = sbr.rel (%p198) target = $region28
        $region27: #{tpu_custom_call.1} parent=11 // pred_region
          _
        $region28: #{tpu_custom_call.1} parent=11 // pred_fallthru
          _
      $region12: #{tpu_custom_call.1} parent=5 // pred_fallthru
        _
      %p201 = scmp.lt.s32.totalorder %s18, 2
      // Predicated region
      $region29: #{tpu_custom_call.1} parent=5 // pred_check
        %p202 = pneg %p201
      $region30: #{tpu_custom_call.1} parent=5 // pred_check_branch
        %204 = sbr.rel (%p202) target = $region32
      $region31: #{tpu_custom_call.1} parent=5 // pred_region
        // Predicated region
        $region33: #{tpu_custom_call.1} parent=31 // pred_check
          %p205 = pneg %p38
        $region34: #{tpu_custom_call.1} parent=31 // pred_check_branch
          %207 = sbr.rel (%p205) target = $region36
        $region35: #{tpu_custom_call.1} parent=31 // pred_region
          %s208 = sand.u32 %s28, 1
          %s209 = scalar_lea.sflag [#allocation3], %s208
          %s210 = sand.u32 %s28, 1
          %s211 = smul.addr %s210, 128
          %s212 = scalar_lea.vmem [#allocation2], %s211
          %s213 = smul.u32 16, %s18
          %s215 = ssub.s32 2048, 2048
          %216 = vsyncadd %s209, %s215
          %s217 = smul.addr %s213, 2
          %s218 = smul.addr %s217, 64
          %s219 = scalar_lea.hbm %s0, %s218
          %s220 = sshll.u32 %s212, 4
          %s221 = int_to_ptr.vmem [resolvable:$true] %s220
          %226 = dma.hbm_to_vmem [thread:$0]  %s219, 2048, %s221, %s209, 128, 128, 8
        $region36: #{tpu_custom_call.1} parent=31 // pred_fallthru
          _
      $region32: #{tpu_custom_call.1} parent=5 // pred_fallthru
        _
      %p227 = scmp.le.s32.totalorder 1, %s18
      %p228 = scmp.lt.s32.totalorder %s18, 3
      %p229 = pnand %p227, %p228
      %p230 = pneg %p229
      // Predicated region
      $region37: #{tpu_custom_call.1} parent=5 // pred_check
        _
      $region38: #{tpu_custom_call.1} parent=5 // pred_check_branch
        %232 = sbr.rel (%p229) target = $region40
      $region39: #{tpu_custom_call.1} parent=5 // pred_region
        %s233 = ssub.s32 %s18, 1
        %s234 = sand.u32 %s31, 1
        %s235 = scalar_lea.sflag [#allocation3], %s234
        %s236 = sand.u32 %s31, 1
        %s237 = smul.addr %s236, 128
        %s238 = scalar_lea.vmem [#allocation2], %s237
        // Predicated region
        $region41: #{tpu_custom_call.1} parent=39 // pred_check
          %p239 = pneg %p44
        $region42: #{tpu_custom_call.1} parent=39 // pred_check_branch
          %241 = sbr.rel (%p239) target = $region44
        $region43: #{tpu_custom_call.1} parent=39 // pred_region
          %242 = dma.done %s235, 2048
        $region44: #{tpu_custom_call.1} parent=39 // pred_fallthru
          _
        // Predicated region
        $region45: #{tpu_custom_call.1} parent=39 // pred_check
          %p243 = pneg %p65
        $region46: #{tpu_custom_call.1} parent=39 // pred_check_branch
          %245 = sbr.rel (%p243) target = $region48
        $region47: #{tpu_custom_call.1} parent=39 // pred_region
          %246 = dma.done [#allocation6], 6144
        $region48: #{tpu_custom_call.1} parent=39 // pred_fallthru
          _
        // Predicated region
        $region49: #{tpu_custom_call.1} parent=39 // pred_check
          %p247 = pneg %p107
        $region50: #{tpu_custom_call.1} parent=39 // pred_check_branch
          %249 = sbr.rel (%p247) target = $region52
        $region51: #{tpu_custom_call.1} parent=39 // pred_region
          %250 = dma.done [#allocation6], 1024
        $region52: #{tpu_custom_call.1} parent=39 // pred_fallthru
          _
        %s251 = sand.u32 %s31, 1
        %s252 = scalar_lea.sflag [#allocation3], %s251
        %s253 = sand.u32 %s31, 1
        %s254 = smul.addr %s253, 128
        %s255 = scalar_lea.vmem [#allocation2], %s254
        %p256 = pneg %p44
        %p257 = pneg %p41
        %p258 = pneg %p65
        %p259 = pneg %p62
        %p260 = pneg %p86
        %p261 = pneg %p83
        %p262 = pneg %p107
        %p263 = pneg %p104
        %p264 = pneg %p128
        %p265 = pneg %p125
        %p266 = pneg %p154
        %p267 = pneg %p151
        %s268 = sand.u32 %s141, 1
        %s269 = scalar_lea.sflag [#allocation4], %s268
        %s270 = sand.u32 %s141, 1
        %s271 = smul.addr %s270, 128
        %s272 = scalar_lea.vmem [#allocation8], %s271
        %s273 = smul.u32 16, %s23
        %s274 = smul.u32 16, %s23
        %v276 = vld [vmem:[%s238] sm:$0xff]
        %v277 = vld [vmem:[%s238 + $0x8] sm:$0xff]
        %v278 = vld [vmem:[%s238 + $0x10] sm:$0xff]
        %v279 = vld [vmem:[%s238 + $0x18] sm:$0xff]
        %v280 = vld [vmem:[%s238 + $0x20] sm:$0xff]
        %v281 = vld [vmem:[%s238 + $0x28] sm:$0xff]
        %v282 = vld [vmem:[%s238 + $0x30] sm:$0xff]
        %v283 = vld [vmem:[%s238 + $0x38] sm:$0xff]
        %v284 = vld [vmem:[%s238 + $0x40] sm:$0xff]
        %v285 = vld [vmem:[%s238 + $0x48] sm:$0xff]
        %v286 = vld [vmem:[%s238 + $0x50] sm:$0xff]
        %v287 = vld [vmem:[%s238 + $0x58] sm:$0xff]
        %v288 = vld [vmem:[%s238 + $0x60] sm:$0xff]
        %v289 = vld [vmem:[%s238 + $0x68] sm:$0xff]
        %v290 = vld [vmem:[%s238 + $0x70] sm:$0xff]
        %v291 = vld [vmem:[%s238 + $0x78] sm:$0xff]
        %v292 = vld [vmem:[#allocation5] sm:$0xff]
        %v293 = vld [vmem:[#allocation5 + $0x8] sm:$0xf]
        %v294 = vld [vmem:[#allocation5 + $0xc] sm:$0xff]
        %v295 = vld [vmem:[#allocation5 + $0x14] sm:$0xf]
        %v296 = vld [vmem:[#allocation5 + $0x18] sm:$0xff]
        %v297 = vld [vmem:[#allocation5 + $0x20] sm:$0xf]
        %v298 = vld [vmem:[#allocation5 + $0x24] sm:$0xff]
        %v299 = vld [vmem:[#allocation5 + $0x2c] sm:$0xf]
        %v300 = vld [vmem:[#allocation5 + $0x30] sm:$0xff]
        %v301 = vld [vmem:[#allocation5 + $0x38] sm:$0xf]
        %v302 = vld [vmem:[#allocation5 + $0x3c] sm:$0xff]
        %v303 = vld [vmem:[#allocation5 + $0x44] sm:$0xf]
        %v304 = vld [vmem:[#allocation5 + $0x48] sm:$0xff]
        %v305 = vld [vmem:[#allocation5 + $0x50] sm:$0xf]
        %v306 = vld [vmem:[#allocation5 + $0x54] sm:$0xff]
        %v307 = vld [vmem:[#allocation5 + $0x5c] sm:$0xf]
        %v308 = vld [vmem:[#allocation5 + $0x60] sm:$0xff]
        %v309 = vld [vmem:[#allocation5 + $0x68] sm:$0xf]
        %v310 = vld [vmem:[#allocation5 + $0x6c] sm:$0xff]
        %v311 = vld [vmem:[#allocation5 + $0x74] sm:$0xf]
        %v312 = vld [vmem:[#allocation5 + $0x78] sm:$0xff]
        %v313 = vld [vmem:[#allocation5 + $0x80] sm:$0xf]
        %v314 = vld [vmem:[#allocation5 + $0x84] sm:$0xff]
        %v315 = vld [vmem:[#allocation5 + $0x8c] sm:$0xf]
        %v316 = vld [vmem:[#allocation5 + $0x90] sm:$0xff]
        %v317 = vld [vmem:[#allocation5 + $0x98] sm:$0xf]
        %v318 = vld [vmem:[#allocation5 + $0x9c] sm:$0xff]
        %v319 = vld [vmem:[#allocation5 + $0xa4] sm:$0xf]
        %v320 = vld [vmem:[#allocation5 + $0xa8] sm:$0xff]
        %v321 = vld [vmem:[#allocation5 + $0xb0] sm:$0xf]
        %v322 = vld [vmem:[#allocation5 + $0xb4] sm:$0xff]
        %v323 = vld [vmem:[#allocation5 + $0xbc] sm:$0xf]
        %v324 = vld [vmem:[#allocation5 + $0xc0] sm:$0xff]
        %v325 = vld [vmem:[#allocation5 + $0xc8] sm:$0xf]
        %v326 = vld [vmem:[#allocation5 + $0xcc] sm:$0xff]
        %v327 = vld [vmem:[#allocation5 + $0xd4] sm:$0xf]
        %v328 = vld [vmem:[#allocation5 + $0xd8] sm:$0xff]
        %v329 = vld [vmem:[#allocation5 + $0xe0] sm:$0xf]
        %v330 = vld [vmem:[#allocation5 + $0xe4] sm:$0xff]
        %v331 = vld [vmem:[#allocation5 + $0xec] sm:$0xf]
        %v332 = vld [vmem:[#allocation5 + $0xf0] sm:$0xff]
        %v333 = vld [vmem:[#allocation5 + $0xf8] sm:$0xf]
        %v334 = vld [vmem:[#allocation5 + $0xfc] sm:$0xff]
        %v335 = vld [vmem:[#allocation5 + $0x104] sm:$0xf]
        %v336 = vld [vmem:[#allocation5 + $0x108] sm:$0xff]
        %v337 = vld [vmem:[#allocation5 + $0x110] sm:$0xf]
        %v338 = vld [vmem:[#allocation5 + $0x114] sm:$0xff]
        %v339 = vld [vmem:[#allocation5 + $0x11c] sm:$0xf]
        %v340 = vld [vmem:[#allocation5 + $0x120] sm:$0xff]
        %v341 = vld [vmem:[#allocation5 + $0x128] sm:$0xf]
        %v342 = vld [vmem:[#allocation5 + $0x12c] sm:$0xff]
        %v343 = vld [vmem:[#allocation5 + $0x134] sm:$0xf]
        %v344 = vld [vmem:[#allocation5 + $0x138] sm:$0xff]
        %v345 = vld [vmem:[#allocation5 + $0x140] sm:$0xf]
        %v346 = vld [vmem:[#allocation5 + $0x144] sm:$0xff]
        %v347 = vld [vmem:[#allocation5 + $0x14c] sm:$0xf]
        %v348 = vld [vmem:[#allocation5 + $0x150] sm:$0xff]
        %v349 = vld [vmem:[#allocation5 + $0x158] sm:$0xf]
        %v350 = vld [vmem:[#allocation5 + $0x15c] sm:$0xff]
        %v351 = vld [vmem:[#allocation5 + $0x164] sm:$0xf]
        %v352 = vld [vmem:[#allocation5 + $0x168] sm:$0xff]
        %v353 = vld [vmem:[#allocation5 + $0x170] sm:$0xf]
        %v354 = vld [vmem:[#allocation5 + $0x174] sm:$0xff]
        %v355 = vld [vmem:[#allocation5 + $0x17c] sm:$0xf]
        %v356 = vld [vmem:[%s2] sm:$0x7]
        %v358 = vlaneseq
        %v359 = vshrl.u32 %v358, 7
        %v360 = vsub.s32 0, %v359
        %v361 = vrot.slane %v356, %v360
        %v362 = vlaneseq
        %v363 = vshrl.u32 %v362, 7
        %v364 = vsub.s32 1, %v363
        %v365 = vrot.slane %v356, %v364
        %v366 = vlaneseq
        %v367 = vshrl.u32 %v366, 7
        %v368 = vsub.s32 2, %v367
        %v369 = vrot.slane %v356, %v368
        %v389 = vunpack.c.l.b16 %v276
        %v390 = vunpack.c.h.b16 %v276
        %v391 = vunpack.c.l.b16 %v277
        %v392 = vunpack.c.h.b16 %v277
        %v393 = vunpack.c.l.b16 %v278
        %v394 = vunpack.c.h.b16 %v278
        %v395 = vunpack.c.l.b16 %v279
        %v396 = vunpack.c.h.b16 %v279
        %v397 = vunpack.c.l.b16 %v280
        %v398 = vunpack.c.h.b16 %v280
        %v399 = vunpack.c.l.b16 %v281
        %v400 = vunpack.c.h.b16 %v281
        %v401 = vunpack.c.l.b16 %v282
        %v402 = vunpack.c.h.b16 %v282
        %v403 = vunpack.c.l.b16 %v283
        %v404 = vunpack.c.h.b16 %v283
        %v405 = vunpack.c.l.b16 %v284
        %v406 = vunpack.c.h.b16 %v284
        %v407 = vunpack.c.l.b16 %v285
        %v408 = vunpack.c.h.b16 %v285
        %v409 = vunpack.c.l.b16 %v286
        %v410 = vunpack.c.h.b16 %v286
        %v411 = vunpack.c.l.b16 %v287
        %v412 = vunpack.c.h.b16 %v287
        %v413 = vunpack.c.l.b16 %v288
        %v414 = vunpack.c.h.b16 %v288
        %v415 = vunpack.c.l.b16 %v289
        %v416 = vunpack.c.h.b16 %v289
        %v417 = vunpack.c.l.b16 %v290
        %v418 = vunpack.c.h.b16 %v290
        %v419 = vunpack.c.l.b16 %v291
        %v420 = vunpack.c.h.b16 %v291
        %v421 = vpack.c.b16 %v391, %v389
        %v422 = vpack.c.b16 %v392, %v390
        %v423 = vpack.c.b16 %v395, %v393
        %v424 = vpack.c.b16 %v396, %v394
        %v425 = vpack.c.b16 %v399, %v397
        %v426 = vpack.c.b16 %v400, %v398
        %v427 = vpack.c.b16 %v403, %v401
        %v428 = vpack.c.b16 %v404, %v402
        %v429 = vpack.c.b16 %v407, %v405
        %v430 = vpack.c.b16 %v408, %v406
        %v431 = vpack.c.b16 %v411, %v409
        %v432 = vpack.c.b16 %v412, %v410
        %v433 = vpack.c.b16 %v415, %v413
        %v434 = vpack.c.b16 %v416, %v414
        %v435 = vpack.c.b16 %v419, %v417
        %v436 = vpack.c.b16 %v420, %v418
        %v517 = vunpack.c.l.b16 %v292
        %v518 = vunpack.c.h.b16 %v292
        %v519 = vunpack.c.l.b16 %v293
        %v520 = vunpack.c.l.b16 %v294
        %v521 = vunpack.c.h.b16 %v294
        %v522 = vunpack.c.l.b16 %v295
        %v523 = vunpack.c.l.b16 %v296
        %v524 = vunpack.c.h.b16 %v296
        %v525 = vunpack.c.l.b16 %v297
        %v526 = vunpack.c.l.b16 %v298
        %v527 = vunpack.c.h.b16 %v298
        %v528 = vunpack.c.l.b16 %v299
        %v529 = vunpack.c.l.b16 %v300
        %v530 = vunpack.c.h.b16 %v300
        %v531 = vunpack.c.l.b16 %v301
        %v532 = vunpack.c.l.b16 %v302
        %v533 = vunpack.c.h.b16 %v302
        %v534 = vunpack.c.l.b16 %v303
        %v535 = vunpack.c.l.b16 %v304
        %v536 = vunpack.c.h.b16 %v304
        %v537 = vunpack.c.l.b16 %v305
        %v538 = vunpack.c.l.b16 %v306
        %v539 = vunpack.c.h.b16 %v306
        %v540 = vunpack.c.l.b16 %v307
        %v541 = vunpack.c.l.b16 %v308
        %v542 = vunpack.c.h.b16 %v308
        %v543 = vunpack.c.l.b16 %v309
        %v544 = vunpack.c.l.b16 %v310
        %v545 = vunpack.c.h.b16 %v310
        %v546 = vunpack.c.l.b16 %v311
        %v547 = vunpack.c.l.b16 %v312
        %v548 = vunpack.c.h.b16 %v312
        %v549 = vunpack.c.l.b16 %v313
        %v550 = vunpack.c.l.b16 %v314
        %v551 = vunpack.c.h.b16 %v314
        %v552 = vunpack.c.l.b16 %v315
        %v553 = vunpack.c.l.b16 %v316
        %v554 = vunpack.c.h.b16 %v316
        %v555 = vunpack.c.l.b16 %v317
        %v556 = vunpack.c.l.b16 %v318
        %v557 = vunpack.c.h.b16 %v318
        %v558 = vunpack.c.l.b16 %v319
        %v559 = vunpack.c.l.b16 %v320
        %v560 = vunpack.c.h.b16 %v320
        %v561 = vunpack.c.l.b16 %v321
        %v562 = vunpack.c.l.b16 %v322
        %v563 = vunpack.c.h.b16 %v322
        %v564 = vunpack.c.l.b16 %v323
        %v565 = vunpack.c.l.b16 %v324
        %v566 = vunpack.c.h.b16 %v324
        %v567 = vunpack.c.l.b16 %v325
        %v568 = vunpack.c.l.b16 %v326
        %v569 = vunpack.c.h.b16 %v326
        %v570 = vunpack.c.l.b16 %v327
        %v571 = vunpack.c.l.b16 %v328
        %v572 = vunpack.c.h.b16 %v328
        %v573 = vunpack.c.l.b16 %v329
        %v574 = vunpack.c.l.b16 %v330
        %v575 = vunpack.c.h.b16 %v330
        %v576 = vunpack.c.l.b16 %v331
        %v577 = vunpack.c.l.b16 %v332
        %v578 = vunpack.c.h.b16 %v332
        %v579 = vunpack.c.l.b16 %v333
        %v580 = vunpack.c.l.b16 %v334
        %v581 = vunpack.c.h.b16 %v334
        %v582 = vunpack.c.l.b16 %v335
        %v583 = vunpack.c.l.b16 %v336
        %v584 = vunpack.c.h.b16 %v336
        %v585 = vunpack.c.l.b16 %v337
        %v586 = vunpack.c.l.b16 %v338
        %v587 = vunpack.c.h.b16 %v338
        %v588 = vunpack.c.l.b16 %v339
        %v589 = vunpack.c.l.b16 %v340
        %v590 = vunpack.c.h.b16 %v340
        %v591 = vunpack.c.l.b16 %v341
        %v592 = vunpack.c.l.b16 %v342
        %v593 = vunpack.c.h.b16 %v342
        %v594 = vunpack.c.l.b16 %v343
        %v595 = vunpack.c.l.b16 %v344
        %v596 = vunpack.c.h.b16 %v344
        %v597 = vunpack.c.l.b16 %v345
        %v598 = vunpack.c.l.b16 %v346
        %v599 = vunpack.c.h.b16 %v346
        %v600 = vunpack.c.l.b16 %v347
        %v601 = vunpack.c.l.b16 %v348
        %v602 = vunpack.c.h.b16 %v348
        %v603 = vunpack.c.l.b16 %v349
        %v604 = vunpack.c.l.b16 %v350
        %v605 = vunpack.c.h.b16 %v350
        %v606 = vunpack.c.l.b16 %v351
        %v607 = vunpack.c.l.b16 %v352
        %v608 = vunpack.c.h.b16 %v352
        %v609 = vunpack.c.l.b16 %v353
        %v610 = vunpack.c.l.b16 %v354
        %v611 = vunpack.c.h.b16 %v354
        %v612 = vunpack.c.l.b16 %v355
        %v613 = vpack.c.b16 %v520, %v517
        %v614 = vpack.c.b16 %v521, %v518
        %v615 = vpack.c.b16 %v522, %v519
        %v616 = vpack.c.b16 %v526, %v523
        %v617 = vpack.c.b16 %v527, %v524
        %v618 = vpack.c.b16 %v528, %v525
        %v619 = vpack.c.b16 %v532, %v529
        %v620 = vpack.c.b16 %v533, %v530
        %v621 = vpack.c.b16 %v534, %v531
        %v622 = vpack.c.b16 %v538, %v535
        %v623 = vpack.c.b16 %v539, %v536
        %v624 = vpack.c.b16 %v540, %v537
        %v625 = vpack.c.b16 %v544, %v541
        %v626 = vpack.c.b16 %v545, %v542
        %v627 = vpack.c.b16 %v546, %v543
        %v628 = vpack.c.b16 %v550, %v547
        %v629 = vpack.c.b16 %v551, %v548
        %v630 = vpack.c.b16 %v552, %v549
        %v631 = vpack.c.b16 %v556, %v553
        %v632 = vpack.c.b16 %v557, %v554
        %v633 = vpack.c.b16 %v558, %v555
        %v634 = vpack.c.b16 %v562, %v559
        %v635 = vpack.c.b16 %v563, %v560
        %v636 = vpack.c.b16 %v564, %v561
        %v637 = vpack.c.b16 %v568, %v565
        %v638 = vpack.c.b16 %v569, %v566
        %v639 = vpack.c.b16 %v570, %v567
        %v640 = vpack.c.b16 %v574, %v571
        %v641 = vpack.c.b16 %v575, %v572
        %v642 = vpack.c.b16 %v576, %v573
        %v643 = vpack.c.b16 %v580, %v577
        %v644 = vpack.c.b16 %v581, %v578
        %v645 = vpack.c.b16 %v582, %v579
        %v646 = vpack.c.b16 %v586, %v583
        %v647 = vpack.c.b16 %v587, %v584
        %v648 = vpack.c.b16 %v588, %v585
        %v649 = vpack.c.b16 %v592, %v589
        %v650 = vpack.c.b16 %v593, %v590
        %v651 = vpack.c.b16 %v594, %v591
        %v652 = vpack.c.b16 %v598, %v595
        %v653 = vpack.c.b16 %v599, %v596
        %v654 = vpack.c.b16 %v600, %v597
        %v655 = vpack.c.b16 %v604, %v601
        %v656 = vpack.c.b16 %v605, %v602
        %v657 = vpack.c.b16 %v606, %v603
        %v658 = vpack.c.b16 %v610, %v607
        %v659 = vpack.c.b16 %v611, %v608
        %v660 = vpack.c.b16 %v612, %v609
        %709 = vmatprep.subr.bf16.mxu0 %v614
        %710 = vmatpush1.bf16.msra.mxu0 %v613
        %711 = vmatprep.subr.bf16.mxu0 %v617
        %712 = vmatpush1.bf16.msra.mxu0 %v616
        %713 = vmatprep.subr.bf16.mxu0 %v620
        %714 = vmatpush1.bf16.msra.mxu0 %v619
        %715 = vmatprep.subr.bf16.mxu0 %v623
        %716 = vmatpush1.bf16.msra.mxu0 %v622
        %717 = vmatprep.subr.bf16.mxu0 %v626
        %718 = vmatpush1.bf16.msra.mxu0 %v625
        %719 = vmatprep.subr.bf16.mxu0 %v629
        %720 = vmatpush1.bf16.msra.mxu0 %v628
        %721 = vmatprep.subr.bf16.mxu0 %v632
        %722 = vmatpush1.bf16.msra.mxu0 %v631
        %723 = vmatprep.subr.bf16.mxu0 %v635
        %724 = vmatpush1.bf16.msra.mxu0 %v634
        %725 = vmatprep.subr.bf16.mxu0 %v638
        %726 = vmatpush1.bf16.msra.mxu0 %v637
        %727 = vmatprep.subr.bf16.mxu0 %v641
        %728 = vmatpush1.bf16.msra.mxu0 %v640
        %729 = vmatprep.subr.bf16.mxu0 %v644
        %730 = vmatpush1.bf16.msra.mxu0 %v643
        %731 = vmatprep.subr.bf16.mxu0 %v647
        %732 = vmatpush1.bf16.msra.mxu0 %v646
        %733 = vmatprep.subr.bf16.mxu0 %v650
        %734 = vmatpush1.bf16.msra.mxu0 %v649
        %735 = vmatprep.subr.bf16.mxu0 %v653
        %736 = vmatpush1.bf16.msra.mxu0 %v652
        %737 = vmatprep.subr.bf16.mxu0 %v656
        %738 = vmatpush1.bf16.msra.mxu0 %v655
        %739 = vmatprep.subr.bf16.mxu0 %v659
        %740 = vmatpush1.bf16.msra.mxu0 %v658
        %741 = vmatprep.mubr.bf16.mxu0 %v422
        %742 = vmatmul.mubr.bf16.gmra.mrb[0].mxu0 %v421
        %v743 = vpop.f32.mrb[0].mxu0
        %v744 = vadd.f32 %v361, %v743
        %v745 = vpop.f32.mrb[0].mxu0
        %v746 = vadd.f32 %v365, %v745
        %v747 = vpop.f32.mrb[0].mxu0
        %v748 = vadd.f32 %v361, %v747
        %v749 = vpop.f32.mrb[0].mxu0
        %v750 = vadd.f32 %v365, %v749
        %751 = vmatprep.mubr.bf16.mxu0 %v424
        %752 = vmatmul.mubr.bf16.gmra.mrb[0].mxu0 %v423
        %v753 = vpop.f32.mrb[0].mxu0
        %v754 = vadd.f32 %v361, %v753
        %v755 = vpop.f32.mrb[0].mxu0
        %v756 = vadd.f32 %v365, %v755
        %v757 = vpop.f32.mrb[0].mxu0
        %v758 = vadd.f32 %v361, %v757
        %v759 = vpop.f32.mrb[0].mxu0
        %v760 = vadd.f32 %v365, %v759
        %761 = vmatprep.mubr.bf16.mxu0 %v426
        %762 = vmatmul.mubr.bf16.gmra.mrb[0].mxu0 %v425
        %v763 = vpop.f32.mrb[0].mxu0
        %v764 = vadd.f32 %v361, %v763
        %v765 = vpop.f32.mrb[0].mxu0
        %v766 = vadd.f32 %v365, %v765
        %v767 = vpop.f32.mrb[0].mxu0
        %v768 = vadd.f32 %v361, %v767
        %v769 = vpop.f32.mrb[0].mxu0
        %v770 = vadd.f32 %v365, %v769
        %771 = vmatprep.mubr.bf16.mxu0 %v428
        %772 = vmatmul.mubr.bf16.gmra.mrb[0].mxu0 %v427
        %v773 = vpop.f32.mrb[0].mxu0
        %v774 = vadd.f32 %v361, %v773
        %v775 = vpop.f32.mrb[0].mxu0
        %v776 = vadd.f32 %v365, %v775
        %v777 = vpop.f32.mrb[0].mxu0
        %v778 = vadd.f32 %v361, %v777
        %v779 = vpop.f32.mrb[0].mxu0
        %v780 = vadd.f32 %v365, %v779
        %781 = vmatprep.mubr.bf16.mxu0 %v430
        %782 = vmatmul.mubr.bf16.gmra.mrb[0].mxu0 %v429
        %v783 = vpop.f32.mrb[0].mxu0
        %v784 = vadd.f32 %v361, %v783
        %v785 = vpop.f32.mrb[0].mxu0
        %v786 = vadd.f32 %v365, %v785
        %v787 = vpop.f32.mrb[0].mxu0
        %v788 = vadd.f32 %v361, %v787
        %v789 = vpop.f32.mrb[0].mxu0
        %v790 = vadd.f32 %v365, %v789
        %791 = vmatprep.mubr.bf16.mxu0 %v432
        %792 = vmatmul.mubr.bf16.gmra.mrb[0].mxu0 %v431
        %v793 = vpop.f32.mrb[0].mxu0
        %v794 = vadd.f32 %v361, %v793
        %v795 = vpop.f32.mrb[0].mxu0
        %v796 = vadd.f32 %v365, %v795
        %v797 = vpop.f32.mrb[0].mxu0
        %v798 = vadd.f32 %v361, %v797
        %v799 = vpop.f32.mrb[0].mxu0
        %v800 = vadd.f32 %v365, %v799
        %801 = vmatprep.mubr.bf16.mxu0 %v434
        %802 = vmatmul.mubr.bf16.gmra.mrb[0].mxu0 %v433
        %v803 = vpop.f32.mrb[0].mxu0
        %v804 = vadd.f32 %v361, %v803
        %v805 = vpop.f32.mrb[0].mxu0
        %v806 = vadd.f32 %v365, %v805
        %v807 = vpop.f32.mrb[0].mxu0
        %v808 = vadd.f32 %v361, %v807
        %v809 = vpop.f32.mrb[0].mxu0
        %v810 = vadd.f32 %v365, %v809
        %811 = vmatprep.mubr.bf16.mxu0 %v436
        %812 = vmatmul.mubr.bf16.gmra.mrb[0].mxu0 %v435
        %v813 = vpop.f32.mrb[0].mxu0
        %v814 = vadd.f32 %v361, %v813
        %v815 = vpop.f32.mrb[0].mxu0
        %v816 = vadd.f32 %v365, %v815
        %v817 = vpop.f32.mrb[0].mxu0
        %v818 = vadd.f32 %v361, %v817
        %v819 = vpop.f32.mrb[0].mxu0
        %v820 = vadd.f32 %v365, %v819
        %821 = vdwg.mxu0
        %822 = vmatprep.subr.bf16.mxu0 0
        %823 = vmatpush1.bf16.msra.mxu0 %v615
        %824 = vmatprep.subr.bf16.mxu0 0
        %825 = vmatpush1.bf16.msra.mxu0 %v618
        %826 = vmatprep.subr.bf16.mxu0 0
        %827 = vmatpush1.bf16.msra.mxu0 %v621
        %828 = vmatprep.subr.bf16.mxu0 0
        %829 = vmatpush1.bf16.msra.mxu0 %v624
        %830 = vmatprep.subr.bf16.mxu0 0
        %831 = vmatpush1.bf16.msra.mxu0 %v627
        %832 = vmatprep.subr.bf16.mxu0 0
        %833 = vmatpush1.bf16.msra.mxu0 %v630
        %834 = vmatprep.subr.bf16.mxu0 0
        %835 = vmatpush1.bf16.msra.mxu0 %v633
        %836 = vmatprep.subr.bf16.mxu0 0
        %837 = vmatpush1.bf16.msra.mxu0 %v636
        %838 = vmatprep.subr.bf16.mxu0 0
        %839 = vmatpush1.bf16.msra.mxu0 %v639
        %840 = vmatprep.subr.bf16.mxu0 0
        %841 = vmatpush1.bf16.msra.mxu0 %v642
        %842 = vmatprep.subr.bf16.mxu0 0
        %843 = vmatpush1.bf16.msra.mxu0 %v645
        %844 = vmatprep.subr.bf16.mxu0 0
        %845 = vmatpush1.bf16.msra.mxu0 %v648
        %846 = vmatprep.subr.bf16.mxu0 0
        %847 = vmatpush1.bf16.msra.mxu0 %v651
        %848 = vmatprep.subr.bf16.mxu0 0
        %849 = vmatpush1.bf16.msra.mxu0 %v654
        %850 = vmatprep.subr.bf16.mxu0 0
        %851 = vmatpush1.bf16.msra.mxu0 %v657
        %852 = vmatprep.subr.bf16.mxu0 0
        %853 = vmatpush1.bf16.msra.mxu0 %v660
        %854 = vmatprep.mubr.bf16.mxu0 %v422
        %855 = vmatmul.mubr.bf16.gmra.mrb[0].mxu0 %v421
        %v856 = vpop.f32.mrb[0].mxu0
        %v857 = vadd.f32 %v369, %v856
        %v858 = vpop.f32.mrb[0].mxu0
        %v859 = vpop.f32.mrb[0].mxu0
        %v860 = vadd.f32 %v369, %v859
        %v861 = vpop.f32.mrb[0].mxu0
        %862 = vmatprep.mubr.bf16.mxu0 %v424
        %863 = vmatmul.mubr.bf16.gmra.mrb[0].mxu0 %v423
        %v864 = vpop.f32.mrb[0].mxu0
        %v865 = vadd.f32 %v369, %v864
        %v866 = vpop.f32.mrb[0].mxu0
        %v867 = vpop.f32.mrb[0].mxu0
        %v868 = vadd.f32 %v369, %v867
        %v869 = vpop.f32.mrb[0].mxu0
        %870 = vmatprep.mubr.bf16.mxu0 %v426
        %871 = vmatmul.mubr.bf16.gmra.mrb[0].mxu0 %v425
        %v872 = vpop.f32.mrb[0].mxu0
        %v873 = vadd.f32 %v369, %v872
        %v874 = vpop.f32.mrb[0].mxu0
        %v875 = vpop.f32.mrb[0].mxu0
        %v876 = vadd.f32 %v369, %v875
        %v877 = vpop.f32.mrb[0].mxu0
        %878 = vmatprep.mubr.bf16.mxu0 %v428
        %879 = vmatmul.mubr.bf16.gmra.mrb[0].mxu0 %v427
        %v880 = vpop.f32.mrb[0].mxu0
        %v881 = vadd.f32 %v369, %v880
        %v882 = vpop.f32.mrb[0].mxu0
        %v883 = vpop.f32.mrb[0].mxu0
        %v884 = vadd.f32 %v369, %v883
        %v885 = vpop.f32.mrb[0].mxu0
        %886 = vmatprep.mubr.bf16.mxu0 %v430
        %887 = vmatmul.mubr.bf16.gmra.mrb[0].mxu0 %v429
        %v888 = vpop.f32.mrb[0].mxu0
        %v889 = vadd.f32 %v369, %v888
        %v890 = vpop.f32.mrb[0].mxu0
        %v891 = vpop.f32.mrb[0].mxu0
        %v892 = vadd.f32 %v369, %v891
        %v893 = vpop.f32.mrb[0].mxu0
        %894 = vmatprep.mubr.bf16.mxu0 %v432
        %895 = vmatmul.mubr.bf16.gmra.mrb[0].mxu0 %v431
        %v896 = vpop.f32.mrb[0].mxu0
        %v897 = vadd.f32 %v369, %v896
        %v898 = vpop.f32.mrb[0].mxu0
        %v899 = vpop.f32.mrb[0].mxu0
        %v900 = vadd.f32 %v369, %v899
        %v901 = vpop.f32.mrb[0].mxu0
        %902 = vmatprep.mubr.bf16.mxu0 %v434
        %903 = vmatmul.mubr.bf16.gmra.mrb[0].mxu0 %v433
        %v904 = vpop.f32.mrb[0].mxu0
        %v905 = vadd.f32 %v369, %v904
        %v906 = vpop.f32.mrb[0].mxu0
        %v907 = vpop.f32.mrb[0].mxu0
        %v908 = vadd.f32 %v369, %v907
        %v909 = vpop.f32.mrb[0].mxu0
        %910 = vmatprep.mubr.bf16.mxu0 %v436
        %911 = vmatmul.mubr.bf16.gmra.mrb[0].mxu0 %v435
        %v912 = vpop.f32.mrb[0].mxu0
        %v913 = vadd.f32 %v369, %v912
        %v914 = vpop.f32.mrb[0].mxu0
        %v915 = vpop.f32.mrb[0].mxu0
        %v916 = vadd.f32 %v369, %v915
        %v917 = vpop.f32.mrb[0].mxu0
        %918 = vdwg.mxu0
        %v919 = vxor.u32 %v744, 2147483648
        %v920 = vxor.u32 %v748, 2147483648
        %v921 = vxor.u32 %v754, 2147483648
        %v922 = vxor.u32 %v758, 2147483648
        %v923 = vxor.u32 %v764, 2147483648
        %v924 = vxor.u32 %v768, 2147483648
        %v925 = vxor.u32 %v774, 2147483648
        %v926 = vxor.u32 %v778, 2147483648
        %v927 = vxor.u32 %v784, 2147483648
        %v928 = vxor.u32 %v788, 2147483648
        %v929 = vxor.u32 %v794, 2147483648
        %v930 = vxor.u32 %v798, 2147483648
        %v931 = vxor.u32 %v804, 2147483648
        %v932 = vxor.u32 %v808, 2147483648
        %v933 = vxor.u32 %v814, 2147483648
        %v934 = vxor.u32 %v818, 2147483648
        %v935 = vmul.f32 %v919, 1.442695
        %v936 = vpow.pop %v935
        %v937 = vmul.f32 %v920, 1.442695
        %v938 = vpow.pop %v937
        %v939 = vmul.f32 %v921, 1.442695
        %v940 = vpow.pop %v939
        %v941 = vmul.f32 %v922, 1.442695
        %v942 = vpow.pop %v941
        %v943 = vmul.f32 %v923, 1.442695
        %v944 = vpow.pop %v943
        %v945 = vmul.f32 %v924, 1.442695
        %v946 = vpow.pop %v945
        %v947 = vmul.f32 %v925, 1.442695
        %v948 = vpow.pop %v947
        %v949 = vmul.f32 %v926, 1.442695
        %v950 = vpow.pop %v949
        %v951 = vmul.f32 %v927, 1.442695
        %v952 = vpow.pop %v951
        %v953 = vmul.f32 %v928, 1.442695
        %v954 = vpow.pop %v953
        %v955 = vmul.f32 %v929, 1.442695
        %v956 = vpow.pop %v955
        %v957 = vmul.f32 %v930, 1.442695
        %v958 = vpow.pop %v957
        %v959 = vmul.f32 %v931, 1.442695
        %v960 = vpow.pop %v959
        %v961 = vmul.f32 %v932, 1.442695
        %v962 = vpow.pop %v961
        %v963 = vmul.f32 %v933, 1.442695
        %v964 = vpow.pop %v963
        %v965 = vmul.f32 %v934, 1.442695
        %v966 = vpow.pop %v965
        %v967 = vadd.f32 %v936, 1.0
        %v968 = vadd.f32 %v938, 1.0
        %v969 = vadd.f32 %v940, 1.0
        %v970 = vadd.f32 %v942, 1.0
        %v971 = vadd.f32 %v944, 1.0
        %v972 = vadd.f32 %v946, 1.0
        %v973 = vadd.f32 %v948, 1.0
        %v974 = vadd.f32 %v950, 1.0
        %v975 = vadd.f32 %v952, 1.0
        %v976 = vadd.f32 %v954, 1.0
        %v977 = vadd.f32 %v956, 1.0
        %v978 = vadd.f32 %v958, 1.0
        %v979 = vadd.f32 %v960, 1.0
        %v980 = vadd.f32 %v962, 1.0
        %v981 = vadd.f32 %v964, 1.0
        %v982 = vadd.f32 %v966, 1.0
        %v983 = vrcp.pop %v967
        %v984 = vmul.f32 1.0, %v983
        %v985 = vrcp.pop %v968
        %v986 = vmul.f32 1.0, %v985
        %v987 = vrcp.pop %v969
        %v988 = vmul.f32 1.0, %v987
        %v989 = vrcp.pop %v970
        %v990 = vmul.f32 1.0, %v989
        %v991 = vrcp.pop %v971
        %v992 = vmul.f32 1.0, %v991
        %v993 = vrcp.pop %v972
        %v994 = vmul.f32 1.0, %v993
        %v995 = vrcp.pop %v973
        %v996 = vmul.f32 1.0, %v995
        %v997 = vrcp.pop %v974
        %v998 = vmul.f32 1.0, %v997
        %v999 = vrcp.pop %v975
        %v1000 = vmul.f32 1.0, %v999
        %v1001 = vrcp.pop %v976
        %v1002 = vmul.f32 1.0, %v1001
        %v1003 = vrcp.pop %v977
        %v1004 = vmul.f32 1.0, %v1003
        %v1005 = vrcp.pop %v978
        %v1006 = vmul.f32 1.0, %v1005
        %v1007 = vrcp.pop %v979
        %v1008 = vmul.f32 1.0, %v1007
        %v1009 = vrcp.pop %v980
        %v1010 = vmul.f32 1.0, %v1009
        %v1011 = vrcp.pop %v981
        %v1012 = vmul.f32 1.0, %v1011
        %v1013 = vrcp.pop %v982
        %v1014 = vmul.f32 1.0, %v1013
        %v1015 = vtanh.pop %v746
        %v1016 = vtanh.pop %v750
        %v1017 = vtanh.pop %v756
        %v1018 = vtanh.pop %v760
        %v1019 = vtanh.pop %v766
        %v1020 = vtanh.pop %v770
        %v1021 = vtanh.pop %v776
        %v1022 = vtanh.pop %v780
        %v1023 = vtanh.pop %v786
        %v1024 = vtanh.pop %v790
        %v1025 = vtanh.pop %v796
        %v1026 = vtanh.pop %v800
        %v1027 = vtanh.pop %v806
        %v1028 = vtanh.pop %v810
        %v1029 = vtanh.pop %v816
        %v1030 = vtanh.pop %v820
        %v1031 = vxor.u32 %v857, 2147483648
        %v1032 = vxor.u32 %v860, 2147483648
        %v1033 = vxor.u32 %v865, 2147483648
        %v1034 = vxor.u32 %v868, 2147483648
        %v1035 = vxor.u32 %v873, 2147483648
        %v1036 = vxor.u32 %v876, 2147483648
        %v1037 = vxor.u32 %v881, 2147483648
        %v1038 = vxor.u32 %v884, 2147483648
        %v1039 = vxor.u32 %v889, 2147483648
        %v1040 = vxor.u32 %v892, 2147483648
        %v1041 = vxor.u32 %v897, 2147483648
        %v1042 = vxor.u32 %v900, 2147483648
        %v1043 = vxor.u32 %v905, 2147483648
        %v1044 = vxor.u32 %v908, 2147483648
        %v1045 = vxor.u32 %v913, 2147483648
        %v1046 = vxor.u32 %v916, 2147483648
        %v1047 = vmul.f32 %v1031, 1.442695
        %v1048 = vpow.pop %v1047
        %v1049 = vmul.f32 %v1032, 1.442695
        %v1050 = vpow.pop %v1049
        %v1051 = vmul.f32 %v1033, 1.442695
        %v1052 = vpow.pop %v1051
        %v1053 = vmul.f32 %v1034, 1.442695
        %v1054 = vpow.pop %v1053
        %v1055 = vmul.f32 %v1035, 1.442695
        %v1056 = vpow.pop %v1055
        %v1057 = vmul.f32 %v1036, 1.442695
        %v1058 = vpow.pop %v1057
        %v1059 = vmul.f32 %v1037, 1.442695
        %v1060 = vpow.pop %v1059
        %v1061 = vmul.f32 %v1038, 1.442695
        %v1062 = vpow.pop %v1061
        %v1063 = vmul.f32 %v1039, 1.442695
        %v1064 = vpow.pop %v1063
        %v1065 = vmul.f32 %v1040, 1.442695
        %v1066 = vpow.pop %v1065
        %v1067 = vmul.f32 %v1041, 1.442695
        %v1068 = vpow.pop %v1067
        %v1069 = vmul.f32 %v1042, 1.442695
        %v1070 = vpow.pop %v1069
        %v1071 = vmul.f32 %v1043, 1.442695
        %v1072 = vpow.pop %v1071
        %v1073 = vmul.f32 %v1044, 1.442695
        %v1074 = vpow.pop %v1073
        %v1075 = vmul.f32 %v1045, 1.442695
        %v1076 = vpow.pop %v1075
        %v1077 = vmul.f32 %v1046, 1.442695
        %v1078 = vpow.pop %v1077
        %v1079 = vadd.f32 %v1048, 1.0
        %v1080 = vadd.f32 %v1050, 1.0
        %v1081 = vadd.f32 %v1052, 1.0
        %v1082 = vadd.f32 %v1054, 1.0
        %v1083 = vadd.f32 %v1056, 1.0
        %v1084 = vadd.f32 %v1058, 1.0
        %v1085 = vadd.f32 %v1060, 1.0
        %v1086 = vadd.f32 %v1062, 1.0
        %v1087 = vadd.f32 %v1064, 1.0
        %v1088 = vadd.f32 %v1066, 1.0
        %v1089 = vadd.f32 %v1068, 1.0
        %v1090 = vadd.f32 %v1070, 1.0
        %v1091 = vadd.f32 %v1072, 1.0
        %v1092 = vadd.f32 %v1074, 1.0
        %v1093 = vadd.f32 %v1076, 1.0
        %v1094 = vadd.f32 %v1078, 1.0
        %v1095 = vrcp.pop %v1079
        %v1096 = vmul.f32 1.0, %v1095
        %v1097 = vrcp.pop %v1080
        %v1098 = vmul.f32 1.0, %v1097
        %v1099 = vrcp.pop %v1081
        %v1100 = vmul.f32 1.0, %v1099
        %v1101 = vrcp.pop %v1082
        %v1102 = vmul.f32 1.0, %v1101
        %v1103 = vrcp.pop %v1083
        %v1104 = vmul.f32 1.0, %v1103
        %v1105 = vrcp.pop %v1084
        %v1106 = vmul.f32 1.0, %v1105
        %v1107 = vrcp.pop %v1085
        %v1108 = vmul.f32 1.0, %v1107
        %v1109 = vrcp.pop %v1086
        %v1110 = vmul.f32 1.0, %v1109
        %v1111 = vrcp.pop %v1087
        %v1112 = vmul.f32 1.0, %v1111
        %v1113 = vrcp.pop %v1088
        %v1114 = vmul.f32 1.0, %v1113
        %v1115 = vrcp.pop %v1089
        %v1116 = vmul.f32 1.0, %v1115
        %v1117 = vrcp.pop %v1090
        %v1118 = vmul.f32 1.0, %v1117
        %v1119 = vrcp.pop %v1091
        %v1120 = vmul.f32 1.0, %v1119
        %v1121 = vrcp.pop %v1092
        %v1122 = vmul.f32 1.0, %v1121
        %v1123 = vrcp.pop %v1093
        %v1124 = vmul.f32 1.0, %v1123
        %v1125 = vrcp.pop %v1094
        %v1126 = vmul.f32 1.0, %v1125
        %v1127 = vmul.f32 %v984, %v1015
        %v1128 = vmul.f32 %v986, %v1016
        %v1129 = vmul.f32 %v988, %v1017
        %v1130 = vmul.f32 %v990, %v1018
        %v1131 = vmul.f32 %v992, %v1019
        %v1132 = vmul.f32 %v994, %v1020
        %v1133 = vmul.f32 %v996, %v1021
        %v1134 = vmul.f32 %v998, %v1022
        %v1135 = vmul.f32 %v1000, %v1023
        %v1136 = vmul.f32 %v1002, %v1024
        %v1137 = vmul.f32 %v1004, %v1025
        %v1138 = vmul.f32 %v1006, %v1026
        %v1139 = vmul.f32 %v1008, %v1027
        %v1140 = vmul.f32 %v1010, %v1028
        %v1141 = vmul.f32 %v1012, %v1029
        %v1142 = vmul.f32 %v1014, %v1030
        %v1143 = vtanh.pop %v1127
        %v1144 = vtanh.pop %v1128
        %v1145 = vtanh.pop %v1129
        %v1146 = vtanh.pop %v1130
        %v1147 = vtanh.pop %v1131
        %v1148 = vtanh.pop %v1132
        %v1149 = vtanh.pop %v1133
        %v1150 = vtanh.pop %v1134
        %v1151 = vtanh.pop %v1135
        %v1152 = vtanh.pop %v1136
        %v1153 = vtanh.pop %v1137
        %v1154 = vtanh.pop %v1138
        %v1155 = vtanh.pop %v1139
        %v1156 = vtanh.pop %v1140
        %v1157 = vtanh.pop %v1141
        %v1158 = vtanh.pop %v1142
        %v1159 = vmul.f32 %v1096, %v1143
        %v1160 = vmul.f32 %v1098, %v1144
        %v1161 = vmul.f32 %v1100, %v1145
        %v1162 = vmul.f32 %v1102, %v1146
        %v1163 = vmul.f32 %v1104, %v1147
        %v1164 = vmul.f32 %v1106, %v1148
        %v1165 = vmul.f32 %v1108, %v1149
        %v1166 = vmul.f32 %v1110, %v1150
        %v1167 = vmul.f32 %v1112, %v1151
        %v1168 = vmul.f32 %v1114, %v1152
        %v1169 = vmul.f32 %v1116, %v1153
        %v1170 = vmul.f32 %v1118, %v1154
        %v1171 = vmul.f32 %v1120, %v1155
        %v1172 = vmul.f32 %v1122, %v1156
        %v1173 = vmul.f32 %v1124, %v1157
        %v1174 = vmul.f32 %v1126, %v1158
        %v1175 = vmax.f32 %v1159, 0.0
        %v1176 = vmax.f32 %v1160, 0.0
        %v1177 = vmax.f32 %v1161, 0.0
        %v1178 = vmax.f32 %v1162, 0.0
        %v1179 = vmax.f32 %v1163, 0.0
        %v1180 = vmax.f32 %v1164, 0.0
        %v1181 = vmax.f32 %v1165, 0.0
        %v1182 = vmax.f32 %v1166, 0.0
        %v1183 = vmax.f32 %v1167, 0.0
        %v1184 = vmax.f32 %v1168, 0.0
        %v1185 = vmax.f32 %v1169, 0.0
        %v1186 = vmax.f32 %v1170, 0.0
        %v1187 = vmax.f32 %v1171, 0.0
        %v1188 = vmax.f32 %v1172, 0.0
        %v1189 = vmax.f32 %v1173, 0.0
        %v1190 = vmax.f32 %v1174, 0.0
        %v1191 = vpack.c.bf16 %v1176, %v1175
        %v1192 = vpack.c.bf16 %v1178, %v1177
        %v1193 = vpack.c.bf16 %v1180, %v1179
        %v1194 = vpack.c.bf16 %v1182, %v1181
        %v1195 = vpack.c.bf16 %v1184, %v1183
        %v1196 = vpack.c.bf16 %v1186, %v1185
        %v1197 = vpack.c.bf16 %v1188, %v1187
        %v1198 = vpack.c.bf16 %v1190, %v1189
        %v1199 = vld [vmem:[#allocation7] sm:$0xf]
        %v1200 = vld [vmem:[#allocation7 + $0x4] sm:$0xf]
        %v1201 = vld [vmem:[#allocation7 + $0x8] sm:$0xf]
        %v1202 = vld [vmem:[#allocation7 + $0xc] sm:$0xf]
        %v1203 = vld [vmem:[#allocation7 + $0x10] sm:$0xf]
        %v1204 = vld [vmem:[#allocation7 + $0x14] sm:$0xf]
        %v1205 = vld [vmem:[#allocation7 + $0x18] sm:$0xf]
        %v1206 = vld [vmem:[#allocation7 + $0x1c] sm:$0xf]
        %v1207 = vld [vmem:[#allocation7 + $0x20] sm:$0xf]
        %v1208 = vld [vmem:[#allocation7 + $0x24] sm:$0xf]
        %v1209 = vld [vmem:[#allocation7 + $0x28] sm:$0xf]
        %v1210 = vld [vmem:[#allocation7 + $0x2c] sm:$0xf]
        %v1211 = vld [vmem:[#allocation7 + $0x30] sm:$0xf]
        %v1212 = vld [vmem:[#allocation7 + $0x34] sm:$0xf]
        %v1213 = vld [vmem:[#allocation7 + $0x38] sm:$0xf]
        %v1214 = vld [vmem:[#allocation7 + $0x3c] sm:$0xf]
        %v1215 = vld [vmem:[%s4] sm:$0x1]
        %v1217 = vlaneseq
        %v1218 = vshrl.u32 %v1217, 7
        %v1219 = vsub.s32 0, %v1218
        %v1220 = vrot.slane %v1215, %v1219
        %v1238 = vunpack.c.l.b16 %v1199
        %v1239 = vunpack.c.l.b16 %v1200
        %v1240 = vunpack.c.l.b16 %v1201
        %v1241 = vunpack.c.l.b16 %v1202
        %v1242 = vunpack.c.l.b16 %v1203
        %v1243 = vunpack.c.l.b16 %v1204
        %v1244 = vunpack.c.l.b16 %v1205
        %v1245 = vunpack.c.l.b16 %v1206
        %v1246 = vunpack.c.l.b16 %v1207
        %v1247 = vunpack.c.l.b16 %v1208
        %v1248 = vunpack.c.l.b16 %v1209
        %v1249 = vunpack.c.l.b16 %v1210
        %v1250 = vunpack.c.l.b16 %v1211
        %v1251 = vunpack.c.l.b16 %v1212
        %v1252 = vunpack.c.l.b16 %v1213
        %v1253 = vunpack.c.l.b16 %v1214
        %v1254 = vpack.c.b16 %v1239, %v1238
        %v1255 = vpack.c.b16 %v1241, %v1240
        %v1256 = vpack.c.b16 %v1243, %v1242
        %v1257 = vpack.c.b16 %v1245, %v1244
        %v1258 = vpack.c.b16 %v1247, %v1246
        %v1259 = vpack.c.b16 %v1249, %v1248
        %v1260 = vpack.c.b16 %v1251, %v1250
        %v1261 = vpack.c.b16 %v1253, %v1252
        %1270 = vmatprep.subr.bf16.mxu0 0
        %1271 = vmatpush1.bf16.msra.mxu0 %v1254
        %1272 = vmatprep.subr.bf16.mxu0 0
        %1273 = vmatpush1.bf16.msra.mxu0 %v1255
        %1274 = vmatprep.subr.bf16.mxu0 0
        %1275 = vmatpush1.bf16.msra.mxu0 %v1256
        %1276 = vmatprep.subr.bf16.mxu0 0
        %1277 = vmatpush1.bf16.msra.mxu0 %v1257
        %1278 = vmatprep.subr.bf16.mxu0 0
        %1279 = vmatpush1.bf16.msra.mxu0 %v1258
        %1280 = vmatprep.subr.bf16.mxu0 0
        %1281 = vmatpush1.bf16.msra.mxu0 %v1259
        %1282 = vmatprep.subr.bf16.mxu0 0
        %1283 = vmatpush1.bf16.msra.mxu0 %v1260
        %1284 = vmatprep.subr.bf16.mxu0 0
        %1285 = vmatpush1.bf16.msra.mxu0 %v1261
        %1286 = vmatprep.subr.bf16.mxu0 0
        %1287 = vmatpush1.bf16.msra.mxu0 0
        %1288 = vmatprep.subr.bf16.mxu0 0
        %1289 = vmatpush1.bf16.msra.mxu0 0
        %1290 = vmatprep.subr.bf16.mxu0 0
        %1291 = vmatpush1.bf16.msra.mxu0 0
        %1292 = vmatprep.subr.bf16.mxu0 0
        %1293 = vmatpush1.bf16.msra.mxu0 0
        %1294 = vmatprep.subr.bf16.mxu0 0
        %1295 = vmatpush1.bf16.msra.mxu0 0
        %1296 = vmatprep.subr.bf16.mxu0 0
        %1297 = vmatpush1.bf16.msra.mxu0 0
        %1298 = vmatprep.subr.bf16.mxu0 0
        %1299 = vmatpush1.bf16.msra.mxu0 0
        %1300 = vmatprep.subr.bf16.mxu0 0
        %1301 = vmatpush1.bf16.msra.mxu0 0
        %1302 = vmatprep.mubr.bf16.mxu0 0
        %1303 = vmatmul.mubr.bf16.gmra.mrb[0].mxu0 %v1191
        %v1304 = vpop.f32.mrb[0].mxu0
        %v1305 = vadd.f32 %v1220, %v1304
        %v1306 = vpop.f32.mrb[0].mxu0
        %v1307 = vpop.f32.mrb[0].mxu0
        %v1308 = vadd.f32 %v1220, %v1307
        %v1309 = vpop.f32.mrb[0].mxu0
        %1310 = vmatprep.mubr.bf16.mxu0 0
        %1311 = vmatmul.mubr.bf16.gmra.mrb[0].mxu0 %v1192
        %v1312 = vpop.f32.mrb[0].mxu0
        %v1313 = vadd.f32 %v1220, %v1312
        %v1314 = vpop.f32.mrb[0].mxu0
        %v1315 = vpop.f32.mrb[0].mxu0
        %v1316 = vadd.f32 %v1220, %v1315
        %v1317 = vpop.f32.mrb[0].mxu0
        %1318 = vmatprep.mubr.bf16.mxu0 0
        %1319 = vmatmul.mubr.bf16.gmra.mrb[0].mxu0 %v1193
        %v1320 = vpop.f32.mrb[0].mxu0
        %v1321 = vadd.f32 %v1220, %v1320
        %v1322 = vpop.f32.mrb[0].mxu0
        %v1323 = vpop.f32.mrb[0].mxu0
        %v1324 = vadd.f32 %v1220, %v1323
        %v1325 = vpop.f32.mrb[0].mxu0
        %1326 = vmatprep.mubr.bf16.mxu0 0
        %1327 = vmatmul.mubr.bf16.gmra.mrb[0].mxu0 %v1194
        %v1328 = vpop.f32.mrb[0].mxu0
        %v1329 = vadd.f32 %v1220, %v1328
        %v1330 = vpop.f32.mrb[0].mxu0
        %v1331 = vpop.f32.mrb[0].mxu0
        %v1332 = vadd.f32 %v1220, %v1331
        %v1333 = vpop.f32.mrb[0].mxu0
        %1334 = vmatprep.mubr.bf16.mxu0 0
        %1335 = vmatmul.mubr.bf16.gmra.mrb[0].mxu0 %v1195
        %v1336 = vpop.f32.mrb[0].mxu0
        %v1337 = vadd.f32 %v1220, %v1336
        %v1338 = vpop.f32.mrb[0].mxu0
        %v1339 = vpop.f32.mrb[0].mxu0
        %v1340 = vadd.f32 %v1220, %v1339
        %v1341 = vpop.f32.mrb[0].mxu0
        %1342 = vmatprep.mubr.bf16.mxu0 0
        %1343 = vmatmul.mubr.bf16.gmra.mrb[0].mxu0 %v1196
        %v1344 = vpop.f32.mrb[0].mxu0
        %v1345 = vadd.f32 %v1220, %v1344
        %v1346 = vpop.f32.mrb[0].mxu0
        %v1347 = vpop.f32.mrb[0].mxu0
        %v1348 = vadd.f32 %v1220, %v1347
        %v1349 = vpop.f32.mrb[0].mxu0
        %1350 = vmatprep.mubr.bf16.mxu0 0
        %1351 = vmatmul.mubr.bf16.gmra.mrb[0].mxu0 %v1197
        %v1352 = vpop.f32.mrb[0].mxu0
        %v1353 = vadd.f32 %v1220, %v1352
        %v1354 = vpop.f32.mrb[0].mxu0
        %v1355 = vpop.f32.mrb[0].mxu0
        %v1356 = vadd.f32 %v1220, %v1355
        %v1357 = vpop.f32.mrb[0].mxu0
        %1358 = vmatprep.mubr.bf16.mxu0 0
        %1359 = vmatmul.mubr.bf16.gmra.mrb[0].mxu0 %v1198
        %v1360 = vpop.f32.mrb[0].mxu0
        %v1361 = vadd.f32 %v1220, %v1360
        %v1362 = vpop.f32.mrb[0].mxu0
        %v1363 = vpop.f32.mrb[0].mxu0
        %v1364 = vadd.f32 %v1220, %v1363
        %v1365 = vpop.f32.mrb[0].mxu0
        %1366 = vdwg.mxu0
        %v1367 = vmul.f32 %v1305, %v1305
        %v1368 = vmul.f32 %v1308, %v1308
        %v1369 = vmul.f32 %v1313, %v1313
        %v1370 = vmul.f32 %v1316, %v1316
        %v1371 = vmul.f32 %v1321, %v1321
        %v1372 = vmul.f32 %v1324, %v1324
        %v1373 = vmul.f32 %v1329, %v1329
        %v1374 = vmul.f32 %v1332, %v1332
        %v1375 = vmul.f32 %v1337, %v1337
        %v1376 = vmul.f32 %v1340, %v1340
        %v1377 = vmul.f32 %v1345, %v1345
        %v1378 = vmul.f32 %v1348, %v1348
        %v1379 = vmul.f32 %v1353, %v1353
        %v1380 = vmul.f32 %v1356, %v1356
        %v1381 = vmul.f32 %v1361, %v1361
        %v1382 = vmul.f32 %v1364, %v1364
        %1383 = vadd.xlane.f32.xlu0 %v1367
        %v1384 = vpop.xlane.xlu0 %1383
        %1385 = vadd.xlane.f32.xlu0 %v1368
        %v1386 = vpop.xlane.xlu0 %1385
        %1387 = vadd.xlane.f32.xlu0 %v1369
        %v1388 = vpop.xlane.xlu0 %1387
        %1389 = vadd.xlane.f32.xlu0 %v1370
        %v1390 = vpop.xlane.xlu0 %1389
        %1391 = vadd.xlane.f32.xlu0 %v1371
        %v1392 = vpop.xlane.xlu0 %1391
        %1393 = vadd.xlane.f32.xlu0 %v1372
        %v1394 = vpop.xlane.xlu0 %1393
        %1395 = vadd.xlane.f32.xlu0 %v1373
        %v1396 = vpop.xlane.xlu0 %1395
        %1397 = vadd.xlane.f32.xlu0 %v1374
        %v1398 = vpop.xlane.xlu0 %1397
        %1399 = vadd.xlane.f32.xlu0 %v1375
        %v1400 = vpop.xlane.xlu0 %1399
        %1401 = vadd.xlane.f32.xlu0 %v1376
        %v1402 = vpop.xlane.xlu0 %1401
        %1403 = vadd.xlane.f32.xlu0 %v1377
        %v1404 = vpop.xlane.xlu0 %1403
        %1405 = vadd.xlane.f32.xlu0 %v1378
        %v1406 = vpop.xlane.xlu0 %1405
        %1407 = vadd.xlane.f32.xlu0 %v1379
        %v1408 = vpop.xlane.xlu0 %1407
        %1409 = vadd.xlane.f32.xlu0 %v1380
        %v1410 = vpop.xlane.xlu0 %1409
        %1411 = vadd.xlane.f32.xlu0 %v1381
        %v1412 = vpop.xlane.xlu0 %1411
        %1413 = vadd.xlane.f32.xlu0 %v1382
        %v1414 = vpop.xlane.xlu0 %1413
        %v1415 = vmax.f32 %v1384, 1e-24
        %v1416 = vmax.f32 %v1386, 1e-24
        %v1417 = vmax.f32 %v1388, 1e-24
        %v1418 = vmax.f32 %v1390, 1e-24
        %v1419 = vmax.f32 %v1392, 1e-24
        %v1420 = vmax.f32 %v1394, 1e-24
        %v1421 = vmax.f32 %v1396, 1e-24
        %v1422 = vmax.f32 %v1398, 1e-24
        %v1423 = vmax.f32 %v1400, 1e-24
        %v1424 = vmax.f32 %v1402, 1e-24
        %v1425 = vmax.f32 %v1404, 1e-24
        %v1426 = vmax.f32 %v1406, 1e-24
        %v1427 = vmax.f32 %v1408, 1e-24
        %v1428 = vmax.f32 %v1410, 1e-24
        %v1429 = vmax.f32 %v1412, 1e-24
        %v1430 = vmax.f32 %v1414, 1e-24
        %v1431 = vrsqrt.pop %v1415
        %v1432 = vrsqrt.pop %v1416
        %v1433 = vrsqrt.pop %v1417
        %v1434 = vrsqrt.pop %v1418
        %v1435 = vrsqrt.pop %v1419
        %v1436 = vrsqrt.pop %v1420
        %v1437 = vrsqrt.pop %v1421
        %v1438 = vrsqrt.pop %v1422
        %v1439 = vrsqrt.pop %v1423
        %v1440 = vrsqrt.pop %v1424
        %v1441 = vrsqrt.pop %v1425
        %v1442 = vrsqrt.pop %v1426
        %v1443 = vrsqrt.pop %v1427
        %v1444 = vrsqrt.pop %v1428
        %v1445 = vrsqrt.pop %v1429
        %v1446 = vrsqrt.pop %v1430
        %v1447 = vmul.f32 %v1305, %v1431
        %v1448 = vmul.f32 %v1308, %v1432
        %v1449 = vmul.f32 %v1313, %v1433
        %v1450 = vmul.f32 %v1316, %v1434
        %v1451 = vmul.f32 %v1321, %v1435
        %v1452 = vmul.f32 %v1324, %v1436
        %v1453 = vmul.f32 %v1329, %v1437
        %v1454 = vmul.f32 %v1332, %v1438
        %v1455 = vmul.f32 %v1337, %v1439
        %v1456 = vmul.f32 %v1340, %v1440
        %v1457 = vmul.f32 %v1345, %v1441
        %v1458 = vmul.f32 %v1348, %v1442
        %v1459 = vmul.f32 %v1353, %v1443
        %v1460 = vmul.f32 %v1356, %v1444
        %v1461 = vmul.f32 %v1361, %v1445
        %v1462 = vmul.f32 %v1364, %v1446
        %1463 = vst [vmem:[%s272] sm:$0xff] %v1447
        %1464 = vst [vmem:[%s272 + $0x8] sm:$0xff] %v1448
        %1465 = vst [vmem:[%s272 + $0x10] sm:$0xff] %v1449
        %1466 = vst [vmem:[%s272 + $0x18] sm:$0xff] %v1450
        %1467 = vst [vmem:[%s272 + $0x20] sm:$0xff] %v1451
        %1468 = vst [vmem:[%s272 + $0x28] sm:$0xff] %v1452
        %1469 = vst [vmem:[%s272 + $0x30] sm:$0xff] %v1453
        %1470 = vst [vmem:[%s272 + $0x38] sm:$0xff] %v1454
        %1471 = vst [vmem:[%s272 + $0x40] sm:$0xff] %v1455
        %1472 = vst [vmem:[%s272 + $0x48] sm:$0xff] %v1456
        %1473 = vst [vmem:[%s272 + $0x50] sm:$0xff] %v1457
        %1474 = vst [vmem:[%s272 + $0x58] sm:$0xff] %v1458
        %1475 = vst [vmem:[%s272 + $0x60] sm:$0xff] %v1459
        %1476 = vst [vmem:[%s272 + $0x68] sm:$0xff] %v1460
        %1477 = vst [vmem:[%s272 + $0x70] sm:$0xff] %v1461
        %1478 = vst [vmem:[%s272 + $0x78] sm:$0xff] %v1462
        %s1479 = sand.u32 %s141, 1
        %s1480 = scalar_lea.sflag [#allocation4], %s1479
        %s1481 = sand.u32 %s141, 1
        %s1482 = smul.addr %s1481, 128
        %s1483 = scalar_lea.vmem [#allocation8], %s1482
        // Predicated region
        $region53: #{tpu_custom_call.1} parent=39 // pred_check
          %p1484 = pneg %p151
        $region54: #{tpu_custom_call.1} parent=39 // pred_check_branch
          %1486 = sbr.rel (%p1484) target = $region56
        $region55: #{tpu_custom_call.1} parent=39 // pred_region
          %s1487 = smul.u32 16, %s23
          %s1489 = ssub.s32 2048, 2048
          %1490 = vsyncadd %s1480, %s1489
          %s1491 = smul.addr %s1487, 128
          %s1492 = scalar_lea.hbm %s5, %s1491
          %s1493 = sshll.u32 %s1483, 4
          %s1494 = int_to_ptr.vmem [resolvable:$true] %s1493
          %1499 = dma.vmem_to_hbm [thread:$0]  %s1494, 2048, %s1492, %s1480, 128, 128, 8
        $region56: #{tpu_custom_call.1} parent=39 // pred_fallthru
          _
      $region40: #{tpu_custom_call.1} parent=5 // pred_fallthru
        _
      %p1500 = scmp.le.s32.totalorder 2, %s18
      // Predicated region
      $region57: #{tpu_custom_call.1} parent=5 // pred_check
        %p1501 = pneg %p1500
      $region58: #{tpu_custom_call.1} parent=5 // pred_check_branch
        %1503 = sbr.rel (%p1501) target = $region60
      $region59: #{tpu_custom_call.1} parent=5 // pred_region
        %s1504 = ssub.s32 %s18, 2
        // Predicated region
        $region61: #{tpu_custom_call.1} parent=59 // pred_check
          %p1505 = pneg %p157
        $region62: #{tpu_custom_call.1} parent=59 // pred_check_branch
          %1507 = sbr.rel (%p1505) target = $region64
        $region63: #{tpu_custom_call.1} parent=59 // pred_region
          %s1508 = sand.u32 %s142, 1
          %s1509 = scalar_lea.sflag [#allocation4], %s1508
          %s1510 = sand.u32 %s142, 1
          %s1511 = smul.addr %s1510, 128
          %s1512 = scalar_lea.vmem [#allocation8], %s1511
          %1513 = dma.done %s1509, 2048
        $region64: #{tpu_custom_call.1} parent=59 // pred_fallthru
          _
      $region60: #{tpu_custom_call.1} parent=5 // pred_fallthru
        _
    $region6: #{tpu_custom_call.1} parent=1 // loop_footer
      %s22 = sadd.s32 1, %s18
    $region7: #{tpu_custom_call.1} parent=1 // loop_footer_branch
      %17 = sbr.rel target = $region3
    $region8: #{tpu_custom_call.1} parent=1 // loop_exit
      _
    %1514 = vsyncpa [#allocation3], 1
    %s1515 = scalar_lea.sflag [#allocation3], 1
    %1516 = vsyncpa %s1515, 1
    %1517 = vsyncpa [#allocation6], 1
    %1518 = vsyncpa [#allocation4], 1
    %s1519 = scalar_lea.sflag [#allocation4], 1
    %1520 = vsyncpa %s1519, 1

</llo_original>
